<compile_context>
chip_gen: v6e
topology: v6e:2x2x1
jax: 0.10.0
libtpu: 0.0.40
codegen_flags: <defaults>
</compile_context>

<pallas_src>
import functools

import jax
import jax.numpy as jnp
import numpy as np
from jax import lax
from jax.experimental import pallas as pl
from jax.experimental.pallas import tpu as pltpu

EPS = 1e-5  # PyTorch InstanceNorm2d default eps (affine=False)


def resnet_block_kernel(x_ref, w1_ref, w2_ref, o_ref, *, C, H, W):
    HW = H * W
    x = x_ref[0]  # (C, HW) f32

    # Border masks depend only on the lane index -> build them once at (1, HW).
    p = lax.broadcasted_iota(jnp.int32, (1, HW), 1)
    row_first = p < W
    row_last = p >= HW - W
    if (W & (W - 1)) == 0:
        col = jnp.bitwise_and(p, W - 1)
    else:
        col = p - (p // W) * W
    col_first = col == 0
    col_last = col == W - 1

    def conv3x3(t, w_ref):
        # out[o, p] = sum_{ki,kj,i} w[ki*3+kj, o, i] * tap_{ki,kj}[i, p]
        # where tap_{ki,kj} is `t` shifted by (ki-1, kj-1) with reflection at
        # the image borders (roll + border-mask select).
        up = pltpu.roll(t, W, axis=1)         # row h-1 (wrap fixed by mask)
        down = pltpu.roll(t, HW - W, axis=1)  # row h+1
        rows = (jnp.where(row_first, down, up),   # ki = 0 (reflect h-1 -> h+1)
                t,                                # ki = 1
                jnp.where(row_last, up, down))    # ki = 2 (reflect h+1 -> h-1)
        acc = None
        for ki, r in enumerate(rows):
            left = pltpu.roll(r, 1, axis=1)         # col w-1
            right = pltpu.roll(r, HW - 1, axis=1)   # col w+1
            taps = (jnp.where(col_first, right, left),  # kj = 0
                    r,                                  # kj = 1
                    jnp.where(col_last, left, right))   # kj = 2
            for kj, tap in enumerate(taps):
                part = jnp.dot(w_ref[ki * 3 + kj],
                               tap.astype(jnp.bfloat16),
                               preferred_element_type=jnp.float32)
                acc = part if acc is None else acc + part
        return acc  # (C, HW) f32

    inv_hw = 1.0 / float(HW)

    def instance_norm(t):
        # Single pass: mean and E[x^2]; biased variance, eps inside rsqrt
        # (matches PyTorch InstanceNorm2d, affine=False). All stats in f32.
        mu = jnp.sum(t, axis=1, keepdims=True) * inv_hw
        ex2 = jnp.sum(t * t, axis=1, keepdims=True) * inv_hw
        var = ex2 - mu * mu
        return (t - mu) * lax.rsqrt(var + EPS)

    y = jnp.maximum(instance_norm(conv3x3(x, w1_ref)), 0.0)
    y = instance_norm(conv3x3(y, w2_ref))
    o_ref[0] = (x + y).astype(o_ref.dtype)  # residual connection


def resnet_block(x, w1, b1, w2, b2):
    """Matches `x + block(x)` of the PyTorch ResnetBlock.

    b1/b2 are accepted for API parity but never reach the kernel: a conv bias
    added before InstanceNorm2d(affine=False) is exactly cancelled by the mean
    subtraction, so dropping it changes nothing numerically.
    """
    del b1, b2
    N, C, H, W = x.shape
    HW = H * W

    # Lane-dense activations (spatial on lanes); weights as (9, C_out, C_in)
    # bf16, tap index t = ki*3 + kj matching the in-kernel tap order.
    xf = x.reshape(N, C, HW)

    def prep_w(w):
        return jnp.transpose(w, (2, 3, 0, 1)).reshape(9, C, C).astype(jnp.bfloat16)

    wm1, wm2 = prep_w(w1), prep_w(w2)

    kernel = functools.partial(resnet_block_kernel, C=C, H=H, W=W)
    img_spec = pl.BlockSpec((1, C, HW), lambda n: (n, 0, 0))
    w_spec = pl.BlockSpec((9, C, C), lambda n: (0, 0, 0))  # resident across grid

    out = pl.pallas_call(
        kernel,
        out_shape=jax.ShapeDtypeStruct((N, C, HW), x.dtype),
        grid=(N,),
        in_specs=[img_spec, w_spec, w_spec],
        out_specs=img_spec,
        compiler_params=pltpu.CompilerParams(
            dimension_semantics=("parallel",)),
    )(xf, wm1, wm2)
    return out.reshape(N, C, H, W)


def resnet_block_reference(x, w1, b1, w2, b2):
    """Pure-JAX reference (mirrors the PyTorch module, f32 throughout)."""
    def conv(t, w, b):
        t = jnp.pad(t, ((0, 0), (0, 0), (1, 1), (1, 1)), mode="reflect")
        y = lax.conv_general_dilated(t, w, (1, 1), "VALID",
                                     dimension_numbers=("NCHW", "OIHW", "NCHW"))
        return y + b[None, :, None, None]

    def inorm(t):
        mu = t.mean(axis=(2, 3), keepdims=True)
        var = ((t - mu) ** 2).mean(axis=(2, 3), keepdims=True)
        return (t - mu) / jnp.sqrt(var + EPS)

    y = jnp.maximum(inorm(conv(x, w1, b1)), 0.0)
    y = inorm(conv(y, w2, b2))
    return x + y


if __name__ == "__main__":
    N, dim, H, W = 2, 4, 16, 16

    key = jax.random.PRNGKey(0)
    kx, kw1, kb1, kw2, kb2 = jax.random.split(key, 5)
    x = jax.random.normal(kx, (N, dim, H, W), dtype=jnp.float32)
    w1 = 0.1 * jax.random.normal(kw1, (dim, dim, 3, 3), dtype=jnp.float32)
    b1 = 0.1 * jax.random.normal(kb1, (dim,), dtype=jnp.float32)
    w2 = 0.1 * jax.random.normal(kw2, (dim, dim, 3, 3), dtype=jnp.float32)
    b2 = 0.1 * jax.random.normal(kb2, (dim,), dtype=jnp.float32)

    out = jax.block_until_ready(resnet_block(x, w1, b1, w2, b2))

    ref = resnet_block_reference(x, w1, b1, w2, b2)
    # bf16 MXU operands (f32 accumulation) -> tolerance loosened vs pure f32.
    np.testing.assert_allclose(np.asarray(out), np.asarray(ref),
                               rtol=3e-2, atol=3e-2)

    print("KERNEL_OK")
</pallas_src>

<mosaic_0001>
module attributes {stable_mosaic.version = 11 : i64} {
  func.func @resnet_block_kernel(%arg0: i32, %arg1: memref<1x4x256xf32, #tpu.memory_space<vmem>>, %arg2: memref<9x4x4xbf16, #tpu.memory_space<vmem>>, %arg3: memref<9x4x4xbf16, #tpu.memory_space<vmem>>, %arg4: memref<1x4x256xf32, #tpu.memory_space<vmem>>) attributes {dimension_semantics = [#tpu.dimension_semantics<parallel>], iteration_bounds = array<i64: 2>, scalar_prefetch = 0 : i64, scratch_operands = 0 : i64, tpu.core_type = #tpu.core_type<tc>, window_params = [{transform_indices = @transform_0, window_bounds = array<i64: 1, 4, 256>}, {pipeline_mode = #tpu.pipeline_mode<synchronous>, transform_indices = @transform_1, window_bounds = array<i64: 9, 4, 4>}, {pipeline_mode = #tpu.pipeline_mode<synchronous>, transform_indices = @transform_2, window_bounds = array<i64: 9, 4, 4>}, {transform_indices = @transform_3, window_bounds = array<i64: 1, 4, 256>}]} {
    %c0 = arith.constant 0 : index
    %c0_0 = arith.constant 0 : index
    %c0_1 = arith.constant 0 : index
    %0 = vector.load %arg1[%c0, %c0_0, %c0_1] : memref<1x4x256xf32, #tpu.memory_space<vmem>>, vector<1x4x256xf32>
    %1 = vector.shape_cast %0 : vector<1x4x256xf32> to vector<4x256xf32>
    %2 = tpu.iota {dimensions = array<i32: 1>} : vector<1x256xi32>
    %c16_i32 = arith.constant 16 : i32
    %3 = vector.broadcast %c16_i32 : i32 to vector<1x256xi32>
    %4 = arith.cmpi slt, %2, %3 : vector<1x256xi32>
    %c240_i32 = arith.constant 240 : i32
    %5 = vector.broadcast %c240_i32 : i32 to vector<1x256xi32>
    %6 = arith.cmpi sge, %2, %5 : vector<1x256xi32>
    %c15_i32 = arith.constant 15 : i32
    %7 = vector.broadcast %c15_i32 : i32 to vector<1x256xi32>
    %8 = arith.andi %2, %7 : vector<1x256xi32>
    %c0_i32 = arith.constant 0 : i32
    %9 = vector.broadcast %c0_i32 : i32 to vector<1x256xi32>
    %10 = arith.cmpi eq, %8, %9 : vector<1x256xi32>
    %c15_i32_2 = arith.constant 15 : i32
    %11 = vector.broadcast %c15_i32_2 : i32 to vector<1x256xi32>
    %12 = arith.cmpi eq, %8, %11 : vector<1x256xi32>
    %c16_i32_3 = arith.constant 16 : i32
    %13 = tpu.dynamic_rotate %1 by %c16_i32_3 dim 1 : vector<4x256xf32>, i32 -> vector<4x256xf32>
    %c240_i32_4 = arith.constant 240 : i32
    %14 = tpu.dynamic_rotate %1 by %c240_i32_4 dim 1 : vector<4x256xf32>, i32 -> vector<4x256xf32>
    %15 = vector.shape_cast %4 : vector<1x256xi1> to vector<1x256xi1>
    %16 = vector.broadcast %15 : vector<1x256xi1> to vector<4x256xi1>
    %17 = arith.select %16, %14, %13 : vector<4x256xi1>, vector<4x256xf32>
    %18 = vector.shape_cast %6 : vector<1x256xi1> to vector<1x256xi1>
    %19 = vector.broadcast %18 : vector<1x256xi1> to vector<4x256xi1>
    %20 = arith.select %19, %13, %14 : vector<4x256xi1>, vector<4x256xf32>
    %c1_i32 = arith.constant 1 : i32
    %21 = tpu.dynamic_rotate %17 by %c1_i32 dim 1 : vector<4x256xf32>, i32 -> vector<4x256xf32>
    %c255_i32 = arith.constant 255 : i32
    %22 = tpu.dynamic_rotate %17 by %c255_i32 dim 1 : vector<4x256xf32>, i32 -> vector<4x256xf32>
    %23 = vector.shape_cast %10 : vector<1x256xi1> to vector<1x256xi1>
    %24 = vector.broadcast %23 : vector<1x256xi1> to vector<4x256xi1>
    %25 = arith.select %24, %22, %21 : vector<4x256xi1>, vector<4x256xf32>
    %26 = vector.shape_cast %12 : vector<1x256xi1> to vector<1x256xi1>
    %27 = vector.broadcast %26 : vector<1x256xi1> to vector<4x256xi1>
    %28 = arith.select %27, %21, %22 : vector<4x256xi1>, vector<4x256xf32>
    %c0_5 = arith.constant 0 : index
    %c0_6 = arith.constant 0 : index
    %c0_7 = arith.constant 0 : index
    %29 = vector.load %arg2[%c0_5, %c0_6, %c0_7] : memref<9x4x4xbf16, #tpu.memory_space<vmem>>, vector<1x4x4xbf16>
    %30 = vector.shape_cast %29 : vector<1x4x4xbf16> to vector<4x4xbf16>
    %31 = arith.truncf %25 : vector<4x256xf32> to vector<4x256xbf16>
    %cst = arith.constant dense<0.000000e+00> : vector<4x256xf32>
    %32 = tpu.matmul %30, %31, %cst {dimension_numbers = #tpu.dot_dimension_numbers<[1], [0], [0], [1], [0, 0, 1, 1], [], []>} : vector<4x4xbf16>, vector<4x256xbf16>, vector<4x256xf32> -> vector<4x256xf32>
    %c1 = arith.constant 1 : index
    %c0_8 = arith.constant 0 : index
    %c0_9 = arith.constant 0 : index
    %33 = vector.load %arg2[%c1, %c0_8, %c0_9] : memref<9x4x4xbf16, #tpu.memory_space<vmem>>, vector<1x4x4xbf16>
    %34 = vector.shape_cast %33 : vector<1x4x4xbf16> to vector<4x4xbf16>
    %35 = arith.truncf %17 : vector<4x256xf32> to vector<4x256xbf16>
    %cst_10 = arith.constant dense<0.000000e+00> : vector<4x256xf32>
    %36 = tpu.matmul %34, %35, %cst_10 {dimension_numbers = #tpu.dot_dimension_numbers<[1], [0], [0], [1], [0, 0, 1, 1], [], []>} : vector<4x4xbf16>, vector<4x256xbf16>, vector<4x256xf32> -> vector<4x256xf32>
    %37 = arith.addf %32, %36 : vector<4x256xf32>
    %c2 = arith.constant 2 : index
    %c0_11 = arith.constant 0 : index
    %c0_12 = arith.constant 0 : index
    %38 = vector.load %arg2[%c2, %c0_11, %c0_12] : memref<9x4x4xbf16, #tpu.memory_space<vmem>>, vector<1x4x4xbf16>
    %39 = vector.shape_cast %38 : vector<1x4x4xbf16> to vector<4x4xbf16>
    %40 = arith.truncf %28 : vector<4x256xf32> to vector<4x256xbf16>
    %cst_13 = arith.constant dense<0.000000e+00> : vector<4x256xf32>
    %41 = tpu.matmul %39, %40, %cst_13 {dimension_numbers = #tpu.dot_dimension_numbers<[1], [0], [0], [1], [0, 0, 1, 1], [], []>} : vector<4x4xbf16>, vector<4x256xbf16>, vector<4x256xf32> -> vector<4x256xf32>
    %42 = arith.addf %37, %41 : vector<4x256xf32>
    %c1_i32_14 = arith.constant 1 : i32
    %43 = tpu.dynamic_rotate %1 by %c1_i32_14 dim 1 : vector<4x256xf32>, i32 -> vector<4x256xf32>
    %c255_i32_15 = arith.constant 255 : i32
    %44 = tpu.dynamic_rotate %1 by %c255_i32_15 dim 1 : vector<4x256xf32>, i32 -> vector<4x256xf32>
    %45 = vector.shape_cast %10 : vector<1x256xi1> to vector<1x256xi1>
    %46 = vector.broadcast %45 : vector<1x256xi1> to vector<4x256xi1>
    %47 = arith.select %46, %44, %43 : vector<4x256xi1>, vector<4x256xf32>
    %48 = vector.shape_cast %12 : vector<1x256xi1> to vector<1x256xi1>
    %49 = vector.broadcast %48 : vector<1x256xi1> to vector<4x256xi1>
    %50 = arith.select %49, %43, %44 : vector<4x256xi1>, vector<4x256xf32>
    %c3 = arith.constant 3 : index
    %c0_16 = arith.constant 0 : index
    %c0_17 = arith.constant 0 : index
    %51 = vector.load %arg2[%c3, %c0_16, %c0_17] : memref<9x4x4xbf16, #tpu.memory_space<vmem>>, vector<1x4x4xbf16>
    %52 = vector.shape_cast %51 : vector<1x4x4xbf16> to vector<4x4xbf16>
    %53 = arith.truncf %47 : vector<4x256xf32> to vector<4x256xbf16>
    %cst_18 = arith.constant dense<0.000000e+00> : vector<4x256xf32>
    %54 = tpu.matmul %52, %53, %cst_18 {dimension_numbers = #tpu.dot_dimension_numbers<[1], [0], [0], [1], [0, 0, 1, 1], [], []>} : vector<4x4xbf16>, vector<4x256xbf16>, vector<4x256xf32> -> vector<4x256xf32>
    %55 = arith.addf %42, %54 : vector<4x256xf32>
    %c4 = arith.constant 4 : index
    %c0_19 = arith.constant 0 : index
    %c0_20 = arith.constant 0 : index
    %56 = vector.load %arg2[%c4, %c0_19, %c0_20] : memref<9x4x4xbf16, #tpu.memory_space<vmem>>, vector<1x4x4xbf16>
    %57 = vector.shape_cast %56 : vector<1x4x4xbf16> to vector<4x4xbf16>
    %58 = arith.truncf %1 : vector<4x256xf32> to vector<4x256xbf16>
    %cst_21 = arith.constant dense<0.000000e+00> : vector<4x256xf32>
    %59 = tpu.matmul %57, %58, %cst_21 {dimension_numbers = #tpu.dot_dimension_numbers<[1], [0], [0], [1], [0, 0, 1, 1], [], []>} : vector<4x4xbf16>, vector<4x256xbf16>, vector<4x256xf32> -> vector<4x256xf32>
    %60 = arith.addf %55, %59 : vector<4x256xf32>
    %c5 = arith.constant 5 : index
    %c0_22 = arith.constant 0 : index
    %c0_23 = arith.constant 0 : index
    %61 = vector.load %arg2[%c5, %c0_22, %c0_23] : memref<9x4x4xbf16, #tpu.memory_space<vmem>>, vector<1x4x4xbf16>
    %62 = vector.shape_cast %61 : vector<1x4x4xbf16> to vector<4x4xbf16>
    %63 = arith.truncf %50 : vector<4x256xf32> to vector<4x256xbf16>
    %cst_24 = arith.constant dense<0.000000e+00> : vector<4x256xf32>
    %64 = tpu.matmul %62, %63, %cst_24 {dimension_numbers = #tpu.dot_dimension_numbers<[1], [0], [0], [1], [0, 0, 1, 1], [], []>} : vector<4x4xbf16>, vector<4x256xbf16>, vector<4x256xf32> -> vector<4x256xf32>
    %65 = arith.addf %60, %64 : vector<4x256xf32>
    %c1_i32_25 = arith.constant 1 : i32
    %66 = tpu.dynamic_rotate %20 by %c1_i32_25 dim 1 : vector<4x256xf32>, i32 -> vector<4x256xf32>
    %c255_i32_26 = arith.constant 255 : i32
    %67 = tpu.dynamic_rotate %20 by %c255_i32_26 dim 1 : vector<4x256xf32>, i32 -> vector<4x256xf32>
    %68 = vector.shape_cast %10 : vector<1x256xi1> to vector<1x256xi1>
    %69 = vector.broadcast %68 : vector<1x256xi1> to vector<4x256xi1>
    %70 = arith.select %69, %67, %66 : vector<4x256xi1>, vector<4x256xf32>
    %71 = vector.shape_cast %12 : vector<1x256xi1> to vector<1x256xi1>
    %72 = vector.broadcast %71 : vector<1x256xi1> to vector<4x256xi1>
    %73 = arith.select %72, %66, %67 : vector<4x256xi1>, vector<4x256xf32>
    %c6 = arith.constant 6 : index
    %c0_27 = arith.constant 0 : index
    %c0_28 = arith.constant 0 : index
    %74 = vector.load %arg2[%c6, %c0_27, %c0_28] : memref<9x4x4xbf16, #tpu.memory_space<vmem>>, vector<1x4x4xbf16>
    %75 = vector.shape_cast %74 : vector<1x4x4xbf16> to vector<4x4xbf16>
    %76 = arith.truncf %70 : vector<4x256xf32> to vector<4x256xbf16>
    %cst_29 = arith.constant dense<0.000000e+00> : vector<4x256xf32>
    %77 = tpu.matmul %75, %76, %cst_29 {dimension_numbers = #tpu.dot_dimension_numbers<[1], [0], [0], [1], [0, 0, 1, 1], [], []>} : vector<4x4xbf16>, vector<4x256xbf16>, vector<4x256xf32> -> vector<4x256xf32>
    %78 = arith.addf %65, %77 : vector<4x256xf32>
    %c7 = arith.constant 7 : index
    %c0_30 = arith.constant 0 : index
    %c0_31 = arith.constant 0 : index
    %79 = vector.load %arg2[%c7, %c0_30, %c0_31] : memref<9x4x4xbf16, #tpu.memory_space<vmem>>, vector<1x4x4xbf16>
    %80 = vector.shape_cast %79 : vector<1x4x4xbf16> to vector<4x4xbf16>
    %81 = arith.truncf %20 : vector<4x256xf32> to vector<4x256xbf16>
    %cst_32 = arith.constant dense<0.000000e+00> : vector<4x256xf32>
    %82 = tpu.matmul %80, %81, %cst_32 {dimension_numbers = #tpu.dot_dimension_numbers<[1], [0], [0], [1], [0, 0, 1, 1], [], []>} : vector<4x4xbf16>, vector<4x256xbf16>, vector<4x256xf32> -> vector<4x256xf32>
    %83 = arith.addf %78, %82 : vector<4x256xf32>
    %c8 = arith.constant 8 : index
    %c0_33 = arith.constant 0 : index
    %c0_34 = arith.constant 0 : index
    %84 = vector.load %arg2[%c8, %c0_33, %c0_34] : memref<9x4x4xbf16, #tpu.memory_space<vmem>>, vector<1x4x4xbf16>
    %85 = vector.shape_cast %84 : vector<1x4x4xbf16> to vector<4x4xbf16>
    %86 = arith.truncf %73 : vector<4x256xf32> to vector<4x256xbf16>
    %cst_35 = arith.constant dense<0.000000e+00> : vector<4x256xf32>
    %87 = tpu.matmul %85, %86, %cst_35 {dimension_numbers = #tpu.dot_dimension_numbers<[1], [0], [0], [1], [0, 0, 1, 1], [], []>} : vector<4x4xbf16>, vector<4x256xbf16>, vector<4x256xf32> -> vector<4x256xf32>
    %88 = arith.addf %83, %87 : vector<4x256xf32>
    %cst_36 = arith.constant dense<0.000000e+00> : vector<4xf32>
    %89 = vector.multi_reduction <add>, %88, %cst_36 [1] : vector<4x256xf32> to vector<4xf32>
    %90 = vector.shape_cast %89 : vector<4xf32> to vector<4x1xf32>
    %cst_37 = arith.constant 3.906250e-03 : f32
    %91 = vector.broadcast %cst_37 : f32 to vector<4x1xf32>
    %92 = arith.mulf %90, %91 : vector<4x1xf32>
    %93 = arith.mulf %88, %88 : vector<4x256xf32>
    %cst_38 = arith.constant dense<0.000000e+00> : vector<4xf32>
    %94 = vector.multi_reduction <add>, %93, %cst_38 [1] : vector<4x256xf32> to vector<4xf32>
    %95 = vector.shape_cast %94 : vector<4xf32> to vector<4x1xf32>
    %cst_39 = arith.constant 3.906250e-03 : f32
    %96 = vector.broadcast %cst_39 : f32 to vector<4x1xf32>
    %97 = arith.mulf %95, %96 : vector<4x1xf32>
    %98 = arith.mulf %92, %92 : vector<4x1xf32>
    %99 = arith.subf %97, %98 : vector<4x1xf32>
    %100 = vector.broadcast %92 : vector<4x1xf32> to vector<4x256xf32>
    %101 = arith.subf %88, %100 : vector<4x256xf32>
    %cst_40 = arith.constant 9.99999974E-6 : f32
    %102 = vector.broadcast %cst_40 : f32 to vector<4x1xf32>
    %103 = arith.addf %99, %102 : vector<4x1xf32>
    %104 = math.rsqrt %103 : vector<4x1xf32>
    %105 = vector.broadcast %104 : vector<4x1xf32> to vector<4x256xf32>
    %106 = arith.mulf %101, %105 : vector<4x256xf32>
    %cst_41 = arith.constant 0.000000e+00 : f32
    %107 = vector.broadcast %cst_41 : f32 to vector<4x256xf32>
    %108 = arith.maximumf %106, %107 : vector<4x256xf32>
    %c16_i32_42 = arith.constant 16 : i32
    %109 = tpu.dynamic_rotate %108 by %c16_i32_42 dim 1 : vector<4x256xf32>, i32 -> vector<4x256xf32>
    %c240_i32_43 = arith.constant 240 : i32
    %110 = tpu.dynamic_rotate %108 by %c240_i32_43 dim 1 : vector<4x256xf32>, i32 -> vector<4x256xf32>
    %111 = vector.shape_cast %4 : vector<1x256xi1> to vector<1x256xi1>
    %112 = vector.broadcast %111 : vector<1x256xi1> to vector<4x256xi1>
    %113 = arith.select %112, %110, %109 : vector<4x256xi1>, vector<4x256xf32>
    %114 = vector.shape_cast %6 : vector<1x256xi1> to vector<1x256xi1>
    %115 = vector.broadcast %114 : vector<1x256xi1> to vector<4x256xi1>
    %116 = arith.select %115, %109, %110 : vector<4x256xi1>, vector<4x256xf32>
    %c1_i32_44 = arith.constant 1 : i32
    %117 = tpu.dynamic_rotate %113 by %c1_i32_44 dim 1 : vector<4x256xf32>, i32 -> vector<4x256xf32>
    %c255_i32_45 = arith.constant 255 : i32
    %118 = tpu.dynamic_rotate %113 by %c255_i32_45 dim 1 : vector<4x256xf32>, i32 -> vector<4x256xf32>
    %119 = vector.shape_cast %10 : vector<1x256xi1> to vector<1x256xi1>
    %120 = vector.broadcast %119 : vector<1x256xi1> to vector<4x256xi1>
    %121 = arith.select %120, %118, %117 : vector<4x256xi1>, vector<4x256xf32>
    %122 = vector.shape_cast %12 : vector<1x256xi1> to vector<1x256xi1>
    %123 = vector.broadcast %122 : vector<1x256xi1> to vector<4x256xi1>
    %124 = arith.select %123, %117, %118 : vector<4x256xi1>, vector<4x256xf32>
    %c0_46 = arith.constant 0 : index
    %c0_47 = arith.constant 0 : index
    %c0_48 = arith.constant 0 : index
    %125 = vector.load %arg3[%c0_46, %c0_47, %c0_48] : memref<9x4x4xbf16, #tpu.memory_space<vmem>>, vector<1x4x4xbf16>
    %126 = vector.shape_cast %125 : vector<1x4x4xbf16> to vector<4x4xbf16>
    %127 = arith.truncf %121 : vector<4x256xf32> to vector<4x256xbf16>
    %cst_49 = arith.constant dense<0.000000e+00> : vector<4x256xf32>
    %128 = tpu.matmul %126, %127, %cst_49 {dimension_numbers = #tpu.dot_dimension_numbers<[1], [0], [0], [1], [0, 0, 1, 1], [], []>} : vector<4x4xbf16>, vector<4x256xbf16>, vector<4x256xf32> -> vector<4x256xf32>
    %c1_50 = arith.constant 1 : index
    %c0_51 = arith.constant 0 : index
    %c0_52 = arith.constant 0 : index
    %129 = vector.load %arg3[%c1_50, %c0_51, %c0_52] : memref<9x4x4xbf16, #tpu.memory_space<vmem>>, vector<1x4x4xbf16>
    %130 = vector.shape_cast %129 : vector<1x4x4xbf16> to vector<4x4xbf16>
    %131 = arith.truncf %113 : vector<4x256xf32> to vector<4x256xbf16>
    %cst_53 = arith.constant dense<0.000000e+00> : vector<4x256xf32>
    %132 = tpu.matmul %130, %131, %cst_53 {dimension_numbers = #tpu.dot_dimension_numbers<[1], [0], [0], [1], [0, 0, 1, 1], [], []>} : vector<4x4xbf16>, vector<4x256xbf16>, vector<4x256xf32> -> vector<4x256xf32>
    %133 = arith.addf %128, %132 : vector<4x256xf32>
    %c2_54 = arith.constant 2 : index
    %c0_55 = arith.constant 0 : index
    %c0_56 = arith.constant 0 : index
    %134 = vector.load %arg3[%c2_54, %c0_55, %c0_56] : memref<9x4x4xbf16, #tpu.memory_space<vmem>>, vector<1x4x4xbf16>
    %135 = vector.shape_cast %134 : vector<1x4x4xbf16> to vector<4x4xbf16>
    %136 = arith.truncf %124 : vector<4x256xf32> to vector<4x256xbf16>
    %cst_57 = arith.constant dense<0.000000e+00> : vector<4x256xf32>
    %137 = tpu.matmul %135, %136, %cst_57 {dimension_numbers = #tpu.dot_dimension_numbers<[1], [0], [0], [1], [0, 0, 1, 1], [], []>} : vector<4x4xbf16>, vector<4x256xbf16>, vector<4x256xf32> -> vector<4x256xf32>
    %138 = arith.addf %133, %137 : vector<4x256xf32>
    %c1_i32_58 = arith.constant 1 : i32
    %139 = tpu.dynamic_rotate %108 by %c1_i32_58 dim 1 : vector<4x256xf32>, i32 -> vector<4x256xf32>
    %c255_i32_59 = arith.constant 255 : i32
    %140 = tpu.dynamic_rotate %108 by %c255_i32_59 dim 1 : vector<4x256xf32>, i32 -> vector<4x256xf32>
    %141 = vector.shape_cast %10 : vector<1x256xi1> to vector<1x256xi1>
    %142 = vector.broadcast %141 : vector<1x256xi1> to vector<4x256xi1>
    %143 = arith.select %142, %140, %139 : vector<4x256xi1>, vector<4x256xf32>
    %144 = vector.shape_cast %12 : vector<1x256xi1> to vector<1x256xi1>
    %145 = vector.broadcast %144 : vector<1x256xi1> to vector<4x256xi1>
    %146 = arith.select %145, %139, %140 : vector<4x256xi1>, vector<4x256xf32>
    %c3_60 = arith.constant 3 : index
    %c0_61 = arith.constant 0 : index
    %c0_62 = arith.constant 0 : index
    %147 = vector.load %arg3[%c3_60, %c0_61, %c0_62] : memref<9x4x4xbf16, #tpu.memory_space<vmem>>, vector<1x4x4xbf16>
    %148 = vector.shape_cast %147 : vector<1x4x4xbf16> to vector<4x4xbf16>
    %149 = arith.truncf %143 : vector<4x256xf32> to vector<4x256xbf16>
    %cst_63 = arith.constant dense<0.000000e+00> : vector<4x256xf32>
    %150 = tpu.matmul %148, %149, %cst_63 {dimension_numbers = #tpu.dot_dimension_numbers<[1], [0], [0], [1], [0, 0, 1, 1], [], []>} : vector<4x4xbf16>, vector<4x256xbf16>, vector<4x256xf32> -> vector<4x256xf32>
    %151 = arith.addf %138, %150 : vector<4x256xf32>
    %c4_64 = arith.constant 4 : index
    %c0_65 = arith.constant 0 : index
    %c0_66 = arith.constant 0 : index
    %152 = vector.load %arg3[%c4_64, %c0_65, %c0_66] : memref<9x4x4xbf16, #tpu.memory_space<vmem>>, vector<1x4x4xbf16>
    %153 = vector.shape_cast %152 : vector<1x4x4xbf16> to vector<4x4xbf16>
    %154 = arith.truncf %108 : vector<4x256xf32> to vector<4x256xbf16>
    %cst_67 = arith.constant dense<0.000000e+00> : vector<4x256xf32>
    %155 = tpu.matmul %153, %154, %cst_67 {dimension_numbers = #tpu.dot_dimension_numbers<[1], [0], [0], [1], [0, 0, 1, 1], [], []>} : vector<4x4xbf16>, vector<4x256xbf16>, vector<4x256xf32> -> vector<4x256xf32>
    %156 = arith.addf %151, %155 : vector<4x256xf32>
    %c5_68 = arith.constant 5 : index
    %c0_69 = arith.constant 0 : index
    %c0_70 = arith.constant 0 : index
    %157 = vector.load %arg3[%c5_68, %c0_69, %c0_70] : memref<9x4x4xbf16, #tpu.memory_space<vmem>>, vector<1x4x4xbf16>
    %158 = vector.shape_cast %157 : vector<1x4x4xbf16> to vector<4x4xbf16>
    %159 = arith.truncf %146 : vector<4x256xf32> to vector<4x256xbf16>
    %cst_71 = arith.constant dense<0.000000e+00> : vector<4x256xf32>
    %160 = tpu.matmul %158, %159, %cst_71 {dimension_numbers = #tpu.dot_dimension_numbers<[1], [0], [0], [1], [0, 0, 1, 1], [], []>} : vector<4x4xbf16>, vector<4x256xbf16>, vector<4x256xf32> -> vector<4x256xf32>
    %161 = arith.addf %156, %160 : vector<4x256xf32>
    %c1_i32_72 = arith.constant 1 : i32
    %162 = tpu.dynamic_rotate %116 by %c1_i32_72 dim 1 : vector<4x256xf32>, i32 -> vector<4x256xf32>
    %c255_i32_73 = arith.constant 255 : i32
    %163 = tpu.dynamic_rotate %116 by %c255_i32_73 dim 1 : vector<4x256xf32>, i32 -> vector<4x256xf32>
    %164 = vector.shape_cast %10 : vector<1x256xi1> to vector<1x256xi1>
    %165 = vector.broadcast %164 : vector<1x256xi1> to vector<4x256xi1>
    %166 = arith.select %165, %163, %162 : vector<4x256xi1>, vector<4x256xf32>
    %167 = vector.shape_cast %12 : vector<1x256xi1> to vector<1x256xi1>
    %168 = vector.broadcast %167 : vector<1x256xi1> to vector<4x256xi1>
    %169 = arith.select %168, %162, %163 : vector<4x256xi1>, vector<4x256xf32>
    %c6_74 = arith.constant 6 : index
    %c0_75 = arith.constant 0 : index
    %c0_76 = arith.constant 0 : index
    %170 = vector.load %arg3[%c6_74, %c0_75, %c0_76] : memref<9x4x4xbf16, #tpu.memory_space<vmem>>, vector<1x4x4xbf16>
    %171 = vector.shape_cast %170 : vector<1x4x4xbf16> to vector<4x4xbf16>
    %172 = arith.truncf %166 : vector<4x256xf32> to vector<4x256xbf16>
    %cst_77 = arith.constant dense<0.000000e+00> : vector<4x256xf32>
    %173 = tpu.matmul %171, %172, %cst_77 {dimension_numbers = #tpu.dot_dimension_numbers<[1], [0], [0], [1], [0, 0, 1, 1], [], []>} : vector<4x4xbf16>, vector<4x256xbf16>, vector<4x256xf32> -> vector<4x256xf32>
    %174 = arith.addf %161, %173 : vector<4x256xf32>
    %c7_78 = arith.constant 7 : index
    %c0_79 = arith.constant 0 : index
    %c0_80 = arith.constant 0 : index
    %175 = vector.load %arg3[%c7_78, %c0_79, %c0_80] : memref<9x4x4xbf16, #tpu.memory_space<vmem>>, vector<1x4x4xbf16>
    %176 = vector.shape_cast %175 : vector<1x4x4xbf16> to vector<4x4xbf16>
    %177 = arith.truncf %116 : vector<4x256xf32> to vector<4x256xbf16>
    %cst_81 = arith.constant dense<0.000000e+00> : vector<4x256xf32>
    %178 = tpu.matmul %176, %177, %cst_81 {dimension_numbers = #tpu.dot_dimension_numbers<[1], [0], [0], [1], [0, 0, 1, 1], [], []>} : vector<4x4xbf16>, vector<4x256xbf16>, vector<4x256xf32> -> vector<4x256xf32>
    %179 = arith.addf %174, %178 : vector<4x256xf32>
    %c8_82 = arith.constant 8 : index
    %c0_83 = arith.constant 0 : index
    %c0_84 = arith.constant 0 : index
    %180 = vector.load %arg3[%c8_82, %c0_83, %c0_84] : memref<9x4x4xbf16, #tpu.memory_space<vmem>>, vector<1x4x4xbf16>
    %181 = vector.shape_cast %180 : vector<1x4x4xbf16> to vector<4x4xbf16>
    %182 = arith.truncf %169 : vector<4x256xf32> to vector<4x256xbf16>
    %cst_85 = arith.constant dense<0.000000e+00> : vector<4x256xf32>
    %183 = tpu.matmul %181, %182, %cst_85 {dimension_numbers = #tpu.dot_dimension_numbers<[1], [0], [0], [1], [0, 0, 1, 1], [], []>} : vector<4x4xbf16>, vector<4x256xbf16>, vector<4x256xf32> -> vector<4x256xf32>
    %184 = arith.addf %179, %183 : vector<4x256xf32>
    %cst_86 = arith.constant dense<0.000000e+00> : vector<4xf32>
    %185 = vector.multi_reduction <add>, %184, %cst_86 [1] : vector<4x256xf32> to vector<4xf32>
    %186 = vector.shape_cast %185 : vector<4xf32> to vector<4x1xf32>
    %cst_87 = arith.constant 3.906250e-03 : f32
    %187 = vector.broadcast %cst_87 : f32 to vector<4x1xf32>
    %188 = arith.mulf %186, %187 : vector<4x1xf32>
    %189 = arith.mulf %184, %184 : vector<4x256xf32>
    %cst_88 = arith.constant dense<0.000000e+00> : vector<4xf32>
    %190 = vector.multi_reduction <add>, %189, %cst_88 [1] : vector<4x256xf32> to vector<4xf32>
    %191 = vector.shape_cast %190 : vector<4xf32> to vector<4x1xf32>
    %cst_89 = arith.constant 3.906250e-03 : f32
    %192 = vector.broadcast %cst_89 : f32 to vector<4x1xf32>
    %193 = arith.mulf %191, %192 : vector<4x1xf32>
    %194 = arith.mulf %188, %188 : vector<4x1xf32>
    %195 = arith.subf %193, %194 : vector<4x1xf32>
    %196 = vector.broadcast %188 : vector<4x1xf32> to vector<4x256xf32>
    %197 = arith.subf %184, %196 : vector<4x256xf32>
    %cst_90 = arith.constant 9.99999974E-6 : f32
    %198 = vector.broadcast %cst_90 : f32 to vector<4x1xf32>
    %199 = arith.addf %195, %198 : vector<4x1xf32>
    %200 = math.rsqrt %199 : vector<4x1xf32>
    %201 = vector.broadcast %200 : vector<4x1xf32> to vector<4x256xf32>
    %202 = arith.mulf %197, %201 : vector<4x256xf32>
    %203 = arith.addf %1, %202 : vector<4x256xf32>
    %c0_91 = arith.constant 0 : index
    %c0_92 = arith.constant 0 : index
    %c0_93 = arith.constant 0 : index
    %204 = vector.load %arg4[%c0_91, %c0_92, %c0_93] : memref<1x4x256xf32, #tpu.memory_space<vmem>>, vector<1x4x256xf32>
    %205 = vector.shape_cast %204 : vector<1x4x256xf32> to vector<4x256xf32>
    %206 = vector.shape_cast %203 : vector<4x256xf32> to vector<1x4x256xf32>
    tpu.vector_store %arg4[%c0_91, %c0_92, %c0_93], %206 {strides = array<i32>} : memref<1x4x256xf32, #tpu.memory_space<vmem>>, vector<1x4x256xf32>,
    return
  }
  func.func @transform_0(%arg0: i32) -> (i32, i32, i32) {
    %c0_i32 = arith.constant 0 : i32
    %c0_i32_0 = arith.constant 0 : i32
    %c0_i32_1 = arith.constant 0 : i32
    return %arg0, %c0_i32, %c0_i32_0 : i32, i32, i32
  }
  func.func @transform_1(%arg0: i32) -> (i32, i32, i32) {
    %c0_i32 = arith.constant 0 : i32
    %c0_i32_0 = arith.constant 0 : i32
    %c0_i32_1 = arith.constant 0 : i32
    %c0_i32_2 = arith.constant 0 : i32
    return %c0_i32, %c0_i32_0, %c0_i32_1 : i32, i32, i32
  }
  func.func @transform_2(%arg0: i32) -> (i32, i32, i32) {
    %c0_i32 = arith.constant 0 : i32
    %c0_i32_0 = arith.constant 0 : i32
    %c0_i32_1 = arith.constant 0 : i32
    %c0_i32_2 = arith.constant 0 : i32
    return %c0_i32, %c0_i32_0, %c0_i32_1 : i32, i32, i32
  }
  func.func @transform_3(%arg0: i32) -> (i32, i32, i32) {
    %c0_i32 = arith.constant 0 : i32
    %c0_i32_0 = arith.constant 0 : i32
    %c0_i32_1 = arith.constant 0 : i32
    return %arg0, %c0_i32, %c0_i32_0 : i32, i32, i32
  }
}

</mosaic_0001>

<llo_original>
// kernel: tpu_custom_call.1
$region0: #{tpu_custom_call.1}
  #allocation0 [shape = 'u32[]', space=smem, size = 0x4, offset = 0x4, fixed_abs, tag = 'smem constant byte address 0x4 - core index']
  #allocation1 [shape = 'u32[144,128]{1,0:T(1,128)}', space=vmem, size = 0x12000, scoped, tag = 'internal scratch']
  %s0 = inlined_call_operand.vmem [shape: f32[2,4,256], index: 0, kind: input, shape index: {}]
  %s1 = inlined_call_operand.vmem [shape: bf16[9,4,4], index: 1, kind: input, shape index: {}]
  %s2 = inlined_call_operand.vmem [shape: bf16[9,4,4], index: 2, kind: input, shape index: {}]
  %s3 = inlined_call_operand.hbm [shape: f32[2,4,256], index: 3, kind: output, shape index: {}]
  %s4 = sld [smem:[#allocation0]]
  $region45: #{tpu_custom_call.1} parent=0
    _
  %s6 = ssub.s32 1, %s4
  %s7 = scalar_select 0, %s6, %s4
  $region1: #{tpu_custom_call.1} parent=0
    #allocation2 [shape = 'u8[8192]{0}', space=vmem, size = 0x2000, scoped, tag = 'output window, operand 0']
    #allocation3 [shape = 's32[2]{0}', space=sflag, size = 0x8, scoped, tag = 'scoped memory for tpu_custom_call.1']
    %8 = vsyncpa [#allocation3], 0
    %s9 = scalar_lea.sflag [#allocation3], 1
    %10 = vsyncpa %s9, 0
    loop: start=0, step=1, limit=4
    $region2: #{tpu_custom_call.1} parent=1 // loop_pre_header
      _
    $region3: #{tpu_custom_call.1} parent=1 // loop_header
      %s12 = sphi 0, %s16
      %p13 = scmp.ge.s32.totalorder %s12, 4
      %s22 = sphi 0, %s24
      %s25 = sphi 0, %s22
      %s26 = sphi 0, %s25
      %s42 = sphi 0, %s26
      %s46 = sphi 0, %s46
      %s48 = sphi 0, %s46
      %s49 = sphi 0, %s48
      %s63 = sphi 0, %s49
      %s67 = sphi 0, %s67
      %s69 = sphi 0, %s67
      %s70 = sphi 0, %s69
      %s84 = sphi 0, %s70
      %s90 = sphi 0, %s92
      %s93 = sphi 0, %s90
      %s94 = sphi 0, %s93
      %s110 = sphi 0, %s94
    $region4: #{tpu_custom_call.1} parent=1 // loop_header_branch
      %15 = sbr.rel (%p13) target = $region8
    $region5: #{tpu_custom_call.1} parent=1 // loop_body
      %s17 = ssub.s32 %s12, 1
      %s18 = ssub.s32 %s12, 2
      %s19 = sadd.s32 %s12, 1
      %s20 = ssub.s32 %s12, %s19
      %p21 = scmp.eq.s32.totalorder %s20, 0
      %s23 = sadd.s32 %s22, 1
      %s24 = scalar_select %p21, %s22, %s23
      %p27 = pneg %p21
      %p28 = scmp.eq.s32.totalorder %s12, 1
      %p29 = por %p27, %p28
      %p30 = scmp.ne.s32.totalorder %s22, %s25
      %p31 = scmp.eq.s32.totalorder %s12, 0
      %p32 = por %p30, %p31
      %p33 = scmp.ne.s32.totalorder %s22, %s25
      %p34 = scmp.eq.s32.totalorder %s17, 1
      %p35 = por %p33, %p34
      %p36 = scmp.ne.s32.totalorder %s25, %s26
      %p37 = scmp.eq.s32.totalorder %s17, 0
      %p38 = por %p36, %p37
      %p39 = scmp.ne.s32.totalorder %s25, %s26
      %p40 = scmp.eq.s32.totalorder %s18, 1
      %p41 = por %p39, %p40
      %p43 = scmp.ne.s32.totalorder %s26, %s42
      %p44 = scmp.eq.s32.totalorder %s18, 0
      %p45 = por %p43, %p44
      %s47 = sadd.s32 %s46, 1
      %p50 = scmp.eq.s32.totalorder %s12, 1
      %p51 = scmp.ne.s32.totalorder %s46, %s48
      %p52 = scmp.eq.s32.totalorder %s12, 0
      %p53 = por %p51, %p52
      %p54 = scmp.ne.s32.totalorder %s46, %s48
      %p55 = scmp.eq.s32.totalorder %s17, 1
      %p56 = por %p54, %p55
      %p57 = scmp.ne.s32.totalorder %s48, %s49
      %p58 = scmp.eq.s32.totalorder %s17, 0
      %p59 = por %p57, %p58
      %p60 = scmp.ne.s32.totalorder %s48, %s49
      %p61 = scmp.eq.s32.totalorder %s18, 1
      %p62 = por %p60, %p61
      %p64 = scmp.ne.s32.totalorder %s49, %s63
      %p65 = scmp.eq.s32.totalorder %s18, 0
      %p66 = por %p64, %p65
      %s68 = sadd.s32 %s67, 1
      %p71 = scmp.eq.s32.totalorder %s12, 1
      %p72 = scmp.ne.s32.totalorder %s67, %s69
      %p73 = scmp.eq.s32.totalorder %s12, 0
      %p74 = por %p72, %p73
      %p75 = scmp.ne.s32.totalorder %s67, %s69
      %p76 = scmp.eq.s32.totalorder %s17, 1
      %p77 = por %p75, %p76
      %p78 = scmp.ne.s32.totalorder %s69, %s70
      %p79 = scmp.eq.s32.totalorder %s17, 0
      %p80 = por %p78, %p79
      %p81 = scmp.ne.s32.totalorder %s69, %s70
      %p82 = scmp.eq.s32.totalorder %s18, 1
      %p83 = por %p81, %p82
      %p85 = scmp.ne.s32.totalorder %s70, %s84
      %p86 = scmp.eq.s32.totalorder %s18, 0
      %p87 = por %p85, %p86
      %s88 = ssub.s32 %s12, %s19
      %p89 = scmp.eq.s32.totalorder %s88, 0
      %s91 = sadd.s32 %s90, 1
      %s92 = scalar_select %p89, %s90, %s91
      %p95 = pneg %p89
      %p96 = scmp.eq.s32.totalorder %s12, 1
      %p97 = por %p95, %p96
      %p98 = scmp.ne.s32.totalorder %s90, %s93
      %p99 = scmp.eq.s32.totalorder %s12, 0
      %p100 = por %p98, %p99
      %p101 = scmp.ne.s32.totalorder %s90, %s93
      %p102 = scmp.eq.s32.totalorder %s17, 1
      %p103 = por %p101, %p102
      %p104 = scmp.ne.s32.totalorder %s93, %s94
      %p105 = scmp.eq.s32.totalorder %s17, 0
      %p106 = por %p104, %p105
      %p107 = scmp.ne.s32.totalorder %s93, %s94
      %p108 = scmp.eq.s32.totalorder %s18, 1
      %p109 = por %p107, %p108
      %p111 = scmp.ne.s32.totalorder %s94, %s110
      %p112 = scmp.eq.s32.totalorder %s18, 0
      %p113 = por %p111, %p112
      %p114 = scmp.le.s32.totalorder 1, %s12
      %p115 = scmp.lt.s32.totalorder %s12, 3
      %p116 = pnand %p114, %p115
      %p117 = pneg %p116
      // Predicated region
      $region9: #{tpu_custom_call.1} parent=5 // pred_check
        _
      $region10: #{tpu_custom_call.1} parent=5 // pred_check_branch
        %119 = sbr.rel (%p116) target = $region12
      $region11: #{tpu_custom_call.1} parent=5 // pred_region
        %s120 = ssub.s32 %s12, 1
        // Predicated region
        $region13: #{tpu_custom_call.1} parent=11 // pred_check
          %p121 = pneg %p59
        $region14: #{tpu_custom_call.1} parent=11 // pred_check_branch
          %123 = sbr.rel (%p121) target = $region16
        $region15: #{tpu_custom_call.1} parent=11 // pred_region
          _
        $region16: #{tpu_custom_call.1} parent=11 // pred_fallthru
          _
        // Predicated region
        $region17: #{tpu_custom_call.1} parent=11 // pred_check
          %p124 = pneg %p80
        $region18: #{tpu_custom_call.1} parent=11 // pred_check_branch
          %126 = sbr.rel (%p124) target = $region20
        $region19: #{tpu_custom_call.1} parent=11 // pred_region
          _
        $region20: #{tpu_custom_call.1} parent=11 // pred_fallthru
          _
      $region12: #{tpu_custom_call.1} parent=5 // pred_fallthru
        _
      %p127 = scmp.lt.s32.totalorder %s12, 2
      // Predicated region
      $region21: #{tpu_custom_call.1} parent=5 // pred_check
        %p128 = pneg %p127
      $region22: #{tpu_custom_call.1} parent=5 // pred_check_branch
        %130 = sbr.rel (%p128) target = $region24
      $region23: #{tpu_custom_call.1} parent=5 // pred_region
        // Predicated region
        $region25: #{tpu_custom_call.1} parent=23 // pred_check
          %p131 = pneg %p32
        $region26: #{tpu_custom_call.1} parent=23 // pred_check_branch
          %133 = sbr.rel (%p131) target = $region28
        $region27: #{tpu_custom_call.1} parent=23 // pred_region
          %p134 = scmp.lt.s32.totalorder %s12, 1
          %s135 = scalar_select %p134, %s12, 1
          %s136 = smul.addr %s135, 2
          %s137 = smul.addr %s136, 4
          %s138 = scalar_lea.vmem %s0, %s137
        $region28: #{tpu_custom_call.1} parent=23 // pred_fallthru
          _
      $region24: #{tpu_custom_call.1} parent=5 // pred_fallthru
        _
      %p139 = scmp.le.s32.totalorder 1, %s12
      %p140 = scmp.lt.s32.totalorder %s12, 3
      %p141 = pnand %p139, %p140
      %p142 = pneg %p141
      // Predicated region
      $region29: #{tpu_custom_call.1} parent=5 // pred_check
        _
      $region30: #{tpu_custom_call.1} parent=5 // pred_check_branch
        %144 = sbr.rel (%p141) target = $region32
      $region31: #{tpu_custom_call.1} parent=5 // pred_region
        %s145 = ssub.s32 %s12, 1
        %p146 = scmp.lt.s32.totalorder %s17, 1
        %s147 = scalar_select %p146, %s17, 1
        %s148 = smul.addr %s147, 2
        %s149 = smul.addr %s148, 4
        %s150 = scalar_lea.vmem %s0, %s149
        %p151 = pneg %p38
        %p152 = pneg %p35
        %p153 = pneg %p59
        %p154 = pneg %p56
        %p155 = pneg %p80
        %p156 = pneg %p77
        %p157 = pneg %p106
        %p158 = pneg %p103
        %s159 = sand.u32 %s93, 1
        %s160 = scalar_lea.sflag [#allocation3], %s159
        %s161 = sand.u32 %s93, 1
        %s162 = smul.addr %s161, 8
        %s163 = scalar_lea.vmem [#allocation2], %s162
        %p164 = scmp.lt.s32.totalorder %s17, 1
        %s165 = scalar_select %p164, %s17, 1
        %s166 = smul.addr %s165, 2
        %s167 = smul.addr %s166, 4
        %s168 = scalar_lea.vmem %s0, %s167
        %v170 = vld [vmem:[%s168] sm:$0xff]
        %v171 = vlaneseq
        %v172 = vand.u32 %v171, 127
        %v173 = vadd.s32 %v172, 128
        %vm174 = vcmp.lt.s32.totalorder %v172, 16
        %vm175 = vcmp.lt.s32.totalorder %v173, 16
        %vm176 = vcmp.ge.s32.totalorder %v172, 240
        %vm177 = vcmp.ge.s32.totalorder %v173, 240
        %v178 = vand.u32 %v172, 15
        %v179 = vand.u32 %v173, 15
        %vm180 = vcmp.eq.s32.totalorder %v178, 0
        %vm181 = vcmp.eq.s32.totalorder %v179, 0
        %vm182 = vcmp.eq.s32.totalorder %v178, 15
        %vm183 = vcmp.eq.s32.totalorder %v179, 15
        %v185 = vcombine.high %v170, %v170
        %187 = vrot.lane.b32.xlu0 %v170, 16
        %v188 = vpop.permute.xlu0 %187
        %189 = vrot.lane.b32.xlu0 %v185, 16
        %v190 = vpop.permute.xlu0 %189
        %v191 = vsel %vm174, %v188, %v190
        %v192 = vsel %vm174, %v190, %v188
        %193 = vrot.lane.b32.xlu0 %v170, 112
        %v194 = vpop.permute.xlu0 %193
        %195 = vrot.lane.b32.xlu0 %v185, 112
        %v196 = vpop.permute.xlu0 %195
        %vm197 = vcmp.lt.s32.totalorder %v172, 112
        %v198 = vsel %vm197, %v194, %v196
        %v199 = vsel %vm197, %v196, %v194
        %v200 = vsel %vm174, 1, 0
        %v201 = vsel %vm175, 1, 0
        %vm202 = vcmp.eq.s32.totalorder %v200, 1
        %vm203 = vcmp.eq.s32.totalorder %v201, 1
        %v204 = vsel %vm202, %v198, %v192
        %v205 = vsel %vm203, %v199, %v191
        %v206 = vsel %vm176, 1, 0
        %v207 = vsel %vm177, 1, 0
        %vm208 = vcmp.eq.s32.totalorder %v206, 1
        %vm209 = vcmp.eq.s32.totalorder %v207, 1
        %v210 = vsel %vm208, %v192, %v198
        %v211 = vsel %vm209, %v191, %v199
        %212 = vrot.lane.b32.xlu0 %v204, 1
        %v213 = vpop.permute.xlu0 %212
        %214 = vrot.lane.b32.xlu0 %v205, 1
        %v215 = vpop.permute.xlu0 %214
        %vm216 = vcmp.lt.s32.totalorder %v172, 1
        %v217 = vsel %vm216, %v213, %v215
        %v218 = vsel %vm216, %v215, %v213
        %219 = vrot.lane.b32.xlu0 %v204, 127
        %v220 = vpop.permute.xlu0 %219
        %221 = vrot.lane.b32.xlu0 %v205, 127
        %v222 = vpop.permute.xlu0 %221
        %vm223 = vcmp.lt.s32.totalorder %v172, 127
        %v224 = vsel %vm223, %v220, %v222
        %v225 = vsel %vm223, %v222, %v220
        %v226 = vsel %vm180, 1, 0
        %v227 = vsel %vm181, 1, 0
        %vm228 = vcmp.eq.s32.totalorder %v226, 1
        %vm229 = vcmp.eq.s32.totalorder %v227, 1
        %v230 = vsel %vm228, %v224, %v218
        %v231 = vsel %vm229, %v225, %v217
        %v232 = vsel %vm182, 1, 0
        %v233 = vsel %vm183, 1, 0
        %vm234 = vcmp.eq.s32.totalorder %v232, 1
        %vm235 = vcmp.eq.s32.totalorder %v233, 1
        %v236 = vsel %vm234, %v218, %v224
        %v237 = vsel %vm235, %v217, %v225
        %v238 = vld [vmem:[%s1] sm:$0x3]
        %v239 = vpack.c.bf16 %v230, %v230
        %v240 = vpack.c.bf16 %v231, %v231
        %s241 = scalar_lea.vmem %s1, 2
        %v242 = vld [vmem:[%s241] sm:$0x3]
        %v243 = vpack.c.bf16 %v204, %v204
        %v244 = vpack.c.bf16 %v205, %v205
        %vm245 = vcmask 31744
        %v247 = vsel %vm245, %v242, 0
        %vm249 = vcmask 1041408
        %v251 = vsel %vm249, %v243, 0
        %v254 = vsel %vm249, %v244, 0
        %256 = vmatprep.subr.bf16.mxu0 0
        %257 = vmatpush1.bf16.msra.mxu0 0
        %258 = vmatprep.subr.bf16.mxu0 0
        %259 = vmatpush1.bf16.msra.mxu0 0
        %260 = vmatprep.subr.bf16.mxu0 0
        %261 = vmatpush1.bf16.msra.mxu0 0
        %262 = vmatprep.subr.bf16.mxu0 0
        %263 = vmatpush1.bf16.msra.mxu0 0
        %264 = vmatprep.subr.bf16.mxu0 0
        %265 = vmatpush1.bf16.msra.mxu0 0
        %266 = vmatprep.subr.bf16.mxu0 0
        %267 = vmatpush1.bf16.msra.mxu0 0
        %268 = vmatprep.subr.bf16.mxu0 0
        %269 = vmatpush1.bf16.msra.mxu0 0
        %270 = vmatprep.subr.bf16.mxu0 %v254
        %271 = vmatpush1.bf16.msra.mxu0 %v251
        %272 = vmatprep.subr.bf16.mxu0 0
        %273 = vmatpush2.bf16.msra.mxu0 0
        %274 = vmatprep.subr.bf16.mxu0 0
        %275 = vmatpush2.bf16.msra.mxu0 0
        %276 = vmatprep.subr.bf16.mxu0 0
        %277 = vmatpush2.bf16.msra.mxu0 0
        %278 = vmatprep.subr.bf16.mxu0 0
        %279 = vmatpush2.bf16.msra.mxu0 0
        %280 = vmatprep.subr.bf16.mxu0 0
        %281 = vmatpush2.bf16.msra.mxu0 0
        %282 = vmatprep.subr.bf16.mxu0 0
        %283 = vmatpush2.bf16.msra.mxu0 0
        %284 = vmatprep.subr.bf16.mxu0 0
        %285 = vmatpush2.bf16.msra.mxu0 0
        %286 = vmatprep.subr.bf16.mxu0 0
        %287 = vmatpush2.bf16.msra.mxu0 0
        %288 = vmatprep.mubr.bf16.mxu0 0
        %289 = vmatmul.mubr.bf16.gmra.mxu0 %v247
        %v290 = vpop.f32.mrf.mxu0
        %v291 = vadd.f32 0.0, %v290
        %v292 = vpop.f32.mrf.mxu0
        %v293 = vadd.f32 0.0, %v292
        %v294 = vpop.f32.mrf.mxu0
        %v295 = vpop.f32.mrf.mxu0
        %296 = vdwg.mxu0
        %v298 = vsel %vm245, %v238, 0
        %v301 = vsel %vm249, %v239, 0
        %v304 = vsel %vm249, %v240, 0
        %306 = vmatprep.subr.bf16.mxu0 0
        %307 = vmatpush1.bf16.msra.mxu0 0
        %308 = vmatprep.subr.bf16.mxu0 0
        %309 = vmatpush1.bf16.msra.mxu0 0
        %310 = vmatprep.subr.bf16.mxu0 0
        %311 = vmatpush1.bf16.msra.mxu0 0
        %312 = vmatprep.subr.bf16.mxu0 0
        %313 = vmatpush1.bf16.msra.mxu0 0
        %314 = vmatprep.subr.bf16.mxu0 0
        %315 = vmatpush1.bf16.msra.mxu0 0
        %316 = vmatprep.subr.bf16.mxu0 0
        %317 = vmatpush1.bf16.msra.mxu0 0
        %318 = vmatprep.subr.bf16.mxu0 0
        %319 = vmatpush1.bf16.msra.mxu0 0
        %320 = vmatprep.subr.bf16.mxu0 %v304
        %321 = vmatpush1.bf16.msra.mxu0 %v301
        %322 = vmatprep.subr.bf16.mxu0 0
        %323 = vmatpush2.bf16.msra.mxu0 0
        %324 = vmatprep.subr.bf16.mxu0 0
        %325 = vmatpush2.bf16.msra.mxu0 0
        %326 = vmatprep.subr.bf16.mxu0 0
        %327 = vmatpush2.bf16.msra.mxu0 0
        %328 = vmatprep.subr.bf16.mxu0 0
        %329 = vmatpush2.bf16.msra.mxu0 0
        %330 = vmatprep.subr.bf16.mxu0 0
        %331 = vmatpush2.bf16.msra.mxu0 0
        %332 = vmatprep.subr.bf16.mxu0 0
        %333 = vmatpush2.bf16.msra.mxu0 0
        %334 = vmatprep.subr.bf16.mxu0 0
        %335 = vmatpush2.bf16.msra.mxu0 0
        %336 = vmatprep.subr.bf16.mxu0 0
        %337 = vmatpush2.bf16.msra.mxu0 0
        %338 = vmatprep.mubr.bf16.mxu0 0
        %339 = vmatmul.mubr.bf16.gmra.mxu0 %v298
        %v340 = vpop.f32.mrf.mxu0
        %v341 = vadd.f32 %v291, %v340
        %v342 = vpop.f32.mrf.mxu0
        %v343 = vadd.f32 %v293, %v342
        %v344 = vpop.f32.mrf.mxu0
        %v345 = vpop.f32.mrf.mxu0
        %346 = vdwg.mxu0
        %s347 = scalar_lea.vmem %s1, 4
        %v348 = vld [vmem:[%s347] sm:$0x3]
        %v349 = vpack.c.bf16 %v236, %v236
        %v350 = vpack.c.bf16 %v237, %v237
        %v352 = vsel %vm245, %v348, 0
        %v355 = vsel %vm249, %v349, 0
        %v358 = vsel %vm249, %v350, 0
        %360 = vmatprep.subr.bf16.mxu0 0
        %361 = vmatpush1.bf16.msra.mxu0 0
        %362 = vmatprep.subr.bf16.mxu0 0
        %363 = vmatpush1.bf16.msra.mxu0 0
        %364 = vmatprep.subr.bf16.mxu0 0
        %365 = vmatpush1.bf16.msra.mxu0 0
        %366 = vmatprep.subr.bf16.mxu0 0
        %367 = vmatpush1.bf16.msra.mxu0 0
        %368 = vmatprep.subr.bf16.mxu0 0
        %369 = vmatpush1.bf16.msra.mxu0 0
        %370 = vmatprep.subr.bf16.mxu0 0
        %371 = vmatpush1.bf16.msra.mxu0 0
        %372 = vmatprep.subr.bf16.mxu0 0
        %373 = vmatpush1.bf16.msra.mxu0 0
        %374 = vmatprep.subr.bf16.mxu0 %v358
        %375 = vmatpush1.bf16.msra.mxu0 %v355
        %376 = vmatprep.subr.bf16.mxu0 0
        %377 = vmatpush2.bf16.msra.mxu0 0
        %378 = vmatprep.subr.bf16.mxu0 0
        %379 = vmatpush2.bf16.msra.mxu0 0
        %380 = vmatprep.subr.bf16.mxu0 0
        %381 = vmatpush2.bf16.msra.mxu0 0
        %382 = vmatprep.subr.bf16.mxu0 0
        %383 = vmatpush2.bf16.msra.mxu0 0
        %384 = vmatprep.subr.bf16.mxu0 0
        %385 = vmatpush2.bf16.msra.mxu0 0
        %386 = vmatprep.subr.bf16.mxu0 0
        %387 = vmatpush2.bf16.msra.mxu0 0
        %388 = vmatprep.subr.bf16.mxu0 0
        %389 = vmatpush2.bf16.msra.mxu0 0
        %390 = vmatprep.subr.bf16.mxu0 0
        %391 = vmatpush2.bf16.msra.mxu0 0
        %392 = vmatprep.mubr.bf16.mxu0 0
        %393 = vmatmul.mubr.bf16.gmra.mxu0 %v352
        %v394 = vpop.f32.mrf.mxu0
        %v395 = vadd.f32 0.0, %v394
        %v396 = vpop.f32.mrf.mxu0
        %v397 = vadd.f32 0.0, %v396
        %v398 = vpop.f32.mrf.mxu0
        %v399 = vpop.f32.mrf.mxu0
        %400 = vdwg.mxu0
        %v401 = vadd.f32 %v341, %v395
        %v402 = vadd.f32 %v343, %v397
        %403 = vrot.lane.b32.xlu0 %v170, 1
        %v404 = vpop.permute.xlu0 %403
        %405 = vrot.lane.b32.xlu0 %v185, 1
        %v406 = vpop.permute.xlu0 %405
        %v407 = vsel %vm216, %v404, %v406
        %v408 = vsel %vm216, %v406, %v404
        %409 = vrot.lane.b32.xlu0 %v170, 127
        %v410 = vpop.permute.xlu0 %409
        %411 = vrot.lane.b32.xlu0 %v185, 127
        %v412 = vpop.permute.xlu0 %411
        %v413 = vsel %vm223, %v410, %v412
        %v414 = vsel %vm223, %v412, %v410
        %v415 = vsel %vm228, %v413, %v408
        %v416 = vsel %vm229, %v414, %v407
        %v417 = vsel %vm234, %v408, %v413
        %v418 = vsel %vm235, %v407, %v414
        %s419 = scalar_lea.vmem %s1, 6
        %v420 = vld [vmem:[%s419] sm:$0x3]
        %v421 = vpack.c.bf16 %v415, %v415
        %v422 = vpack.c.bf16 %v416, %v416
        %v424 = vsel %vm245, %v420, 0
        %v427 = vsel %vm249, %v421, 0
        %v430 = vsel %vm249, %v422, 0
        %432 = vmatprep.subr.bf16.mxu0 0
        %433 = vmatpush1.bf16.msra.mxu0 0
        %434 = vmatprep.subr.bf16.mxu0 0
        %435 = vmatpush1.bf16.msra.mxu0 0
        %436 = vmatprep.subr.bf16.mxu0 0
        %437 = vmatpush1.bf16.msra.mxu0 0
        %438 = vmatprep.subr.bf16.mxu0 0
        %439 = vmatpush1.bf16.msra.mxu0 0
        %440 = vmatprep.subr.bf16.mxu0 0
        %441 = vmatpush1.bf16.msra.mxu0 0
        %442 = vmatprep.subr.bf16.mxu0 0
        %443 = vmatpush1.bf16.msra.mxu0 0
        %444 = vmatprep.subr.bf16.mxu0 0
        %445 = vmatpush1.bf16.msra.mxu0 0
        %446 = vmatprep.subr.bf16.mxu0 %v430
        %447 = vmatpush1.bf16.msra.mxu0 %v427
        %448 = vmatprep.subr.bf16.mxu0 0
        %449 = vmatpush2.bf16.msra.mxu0 0
        %450 = vmatprep.subr.bf16.mxu0 0
        %451 = vmatpush2.bf16.msra.mxu0 0
        %452 = vmatprep.subr.bf16.mxu0 0
        %453 = vmatpush2.bf16.msra.mxu0 0
        %454 = vmatprep.subr.bf16.mxu0 0
        %455 = vmatpush2.bf16.msra.mxu0 0
        %456 = vmatprep.subr.bf16.mxu0 0
        %457 = vmatpush2.bf16.msra.mxu0 0
        %458 = vmatprep.subr.bf16.mxu0 0
        %459 = vmatpush2.bf16.msra.mxu0 0
        %460 = vmatprep.subr.bf16.mxu0 0
        %461 = vmatpush2.bf16.msra.mxu0 0
        %462 = vmatprep.subr.bf16.mxu0 0
        %463 = vmatpush2.bf16.msra.mxu0 0
        %464 = vmatprep.mubr.bf16.mxu0 0
        %465 = vmatmul.mubr.bf16.gmra.mxu0 %v424
        %v466 = vpop.f32.mrf.mxu0
        %v467 = vadd.f32 0.0, %v466
        %v468 = vpop.f32.mrf.mxu0
        %v469 = vadd.f32 0.0, %v468
        %v470 = vpop.f32.mrf.mxu0
        %v471 = vpop.f32.mrf.mxu0
        %472 = vdwg.mxu0
        %v473 = vadd.f32 %v401, %v467
        %v474 = vadd.f32 %v402, %v469
        %s475 = scalar_lea.vmem %s1, 8
        %v476 = vld [vmem:[%s475] sm:$0x3]
        %v477 = vpack.c.bf16 %v170, %v170
        %v478 = vpack.c.bf16 %v185, %v185
        %v480 = vsel %vm245, %v476, 0
        %v483 = vsel %vm249, %v477, 0
        %v486 = vsel %vm249, %v478, 0
        %488 = vmatprep.subr.bf16.mxu0 0
        %489 = vmatpush1.bf16.msra.mxu0 0
        %490 = vmatprep.subr.bf16.mxu0 0
        %491 = vmatpush1.bf16.msra.mxu0 0
        %492 = vmatprep.subr.bf16.mxu0 0
        %493 = vmatpush1.bf16.msra.mxu0 0
        %494 = vmatprep.subr.bf16.mxu0 0
        %495 = vmatpush1.bf16.msra.mxu0 0
        %496 = vmatprep.subr.bf16.mxu0 0
        %497 = vmatpush1.bf16.msra.mxu0 0
        %498 = vmatprep.subr.bf16.mxu0 0
        %499 = vmatpush1.bf16.msra.mxu0 0
        %500 = vmatprep.subr.bf16.mxu0 0
        %501 = vmatpush1.bf16.msra.mxu0 0
        %502 = vmatprep.subr.bf16.mxu0 %v486
        %503 = vmatpush1.bf16.msra.mxu0 %v483
        %504 = vmatprep.subr.bf16.mxu0 0
        %505 = vmatpush2.bf16.msra.mxu0 0
        %506 = vmatprep.subr.bf16.mxu0 0
        %507 = vmatpush2.bf16.msra.mxu0 0
        %508 = vmatprep.subr.bf16.mxu0 0
        %509 = vmatpush2.bf16.msra.mxu0 0
        %510 = vmatprep.subr.bf16.mxu0 0
        %511 = vmatpush2.bf16.msra.mxu0 0
        %512 = vmatprep.subr.bf16.mxu0 0
        %513 = vmatpush2.bf16.msra.mxu0 0
        %514 = vmatprep.subr.bf16.mxu0 0
        %515 = vmatpush2.bf16.msra.mxu0 0
        %516 = vmatprep.subr.bf16.mxu0 0
        %517 = vmatpush2.bf16.msra.mxu0 0
        %518 = vmatprep.subr.bf16.mxu0 0
        %519 = vmatpush2.bf16.msra.mxu0 0
        %520 = vmatprep.mubr.bf16.mxu0 0
        %521 = vmatmul.mubr.bf16.gmra.mxu0 %v480
        %v522 = vpop.f32.mrf.mxu0
        %v523 = vadd.f32 0.0, %v522
        %v524 = vpop.f32.mrf.mxu0
        %v525 = vadd.f32 0.0, %v524
        %v526 = vpop.f32.mrf.mxu0
        %v527 = vpop.f32.mrf.mxu0
        %528 = vdwg.mxu0
        %v529 = vadd.f32 %v473, %v523
        %v530 = vadd.f32 %v474, %v525
        %s531 = scalar_lea.vmem %s1, 10
        %v532 = vld [vmem:[%s531] sm:$0x3]
        %v533 = vpack.c.bf16 %v417, %v417
        %v534 = vpack.c.bf16 %v418, %v418
        %v536 = vsel %vm245, %v532, 0
        %v539 = vsel %vm249, %v533, 0
        %v542 = vsel %vm249, %v534, 0
        %544 = vmatprep.subr.bf16.mxu0 0
        %545 = vmatpush1.bf16.msra.mxu0 0
        %546 = vmatprep.subr.bf16.mxu0 0
        %547 = vmatpush1.bf16.msra.mxu0 0
        %548 = vmatprep.subr.bf16.mxu0 0
        %549 = vmatpush1.bf16.msra.mxu0 0
        %550 = vmatprep.subr.bf16.mxu0 0
        %551 = vmatpush1.bf16.msra.mxu0 0
        %552 = vmatprep.subr.bf16.mxu0 0
        %553 = vmatpush1.bf16.msra.mxu0 0
        %554 = vmatprep.subr.bf16.mxu0 0
        %555 = vmatpush1.bf16.msra.mxu0 0
        %556 = vmatprep.subr.bf16.mxu0 0
        %557 = vmatpush1.bf16.msra.mxu0 0
        %558 = vmatprep.subr.bf16.mxu0 %v542
        %559 = vmatpush1.bf16.msra.mxu0 %v539
        %560 = vmatprep.subr.bf16.mxu0 0
        %561 = vmatpush2.bf16.msra.mxu0 0
        %562 = vmatprep.subr.bf16.mxu0 0
        %563 = vmatpush2.bf16.msra.mxu0 0
        %564 = vmatprep.subr.bf16.mxu0 0
        %565 = vmatpush2.bf16.msra.mxu0 0
        %566 = vmatprep.subr.bf16.mxu0 0
        %567 = vmatpush2.bf16.msra.mxu0 0
        %568 = vmatprep.subr.bf16.mxu0 0
        %569 = vmatpush2.bf16.msra.mxu0 0
        %570 = vmatprep.subr.bf16.mxu0 0
        %571 = vmatpush2.bf16.msra.mxu0 0
        %572 = vmatprep.subr.bf16.mxu0 0
        %573 = vmatpush2.bf16.msra.mxu0 0
        %574 = vmatprep.subr.bf16.mxu0 0
        %575 = vmatpush2.bf16.msra.mxu0 0
        %576 = vmatprep.mubr.bf16.mxu0 0
        %577 = vmatmul.mubr.bf16.gmra.mxu0 %v536
        %v578 = vpop.f32.mrf.mxu0
        %v579 = vadd.f32 0.0, %v578
        %v580 = vpop.f32.mrf.mxu0
        %v581 = vadd.f32 0.0, %v580
        %v582 = vpop.f32.mrf.mxu0
        %v583 = vpop.f32.mrf.mxu0
        %584 = vdwg.mxu0
        %v585 = vadd.f32 %v529, %v579
        %v586 = vadd.f32 %v530, %v581
        %587 = vrot.lane.b32.xlu0 %v210, 1
        %v588 = vpop.permute.xlu0 %587
        %589 = vrot.lane.b32.xlu0 %v211, 1
        %v590 = vpop.permute.xlu0 %589
        %v591 = vsel %vm216, %v588, %v590
        %v592 = vsel %vm216, %v590, %v588
        %593 = vrot.lane.b32.xlu0 %v210, 127
        %v594 = vpop.permute.xlu0 %593
        %595 = vrot.lane.b32.xlu0 %v211, 127
        %v596 = vpop.permute.xlu0 %595
        %v597 = vsel %vm223, %v594, %v596
        %v598 = vsel %vm223, %v596, %v594
        %v599 = vsel %vm228, %v597, %v592
        %v600 = vsel %vm229, %v598, %v591
        %v601 = vsel %vm234, %v592, %v597
        %v602 = vsel %vm235, %v591, %v598
        %s603 = scalar_lea.vmem %s1, 12
        %v604 = vld [vmem:[%s603] sm:$0x3]
        %v605 = vpack.c.bf16 %v599, %v599
        %v606 = vpack.c.bf16 %v600, %v600
        %v608 = vsel %vm245, %v604, 0
        %v611 = vsel %vm249, %v605, 0
        %v614 = vsel %vm249, %v606, 0
        %616 = vmatprep.subr.bf16.mxu0 0
        %617 = vmatpush1.bf16.msra.mxu0 0
        %618 = vmatprep.subr.bf16.mxu0 0
        %619 = vmatpush1.bf16.msra.mxu0 0
        %620 = vmatprep.subr.bf16.mxu0 0
        %621 = vmatpush1.bf16.msra.mxu0 0
        %622 = vmatprep.subr.bf16.mxu0 0
        %623 = vmatpush1.bf16.msra.mxu0 0
        %624 = vmatprep.subr.bf16.mxu0 0
        %625 = vmatpush1.bf16.msra.mxu0 0
        %626 = vmatprep.subr.bf16.mxu0 0
        %627 = vmatpush1.bf16.msra.mxu0 0
        %628 = vmatprep.subr.bf16.mxu0 0
        %629 = vmatpush1.bf16.msra.mxu0 0
        %630 = vmatprep.subr.bf16.mxu0 %v614
        %631 = vmatpush1.bf16.msra.mxu0 %v611
        %632 = vmatprep.subr.bf16.mxu0 0
        %633 = vmatpush2.bf16.msra.mxu0 0
        %634 = vmatprep.subr.bf16.mxu0 0
        %635 = vmatpush2.bf16.msra.mxu0 0
        %636 = vmatprep.subr.bf16.mxu0 0
        %637 = vmatpush2.bf16.msra.mxu0 0
        %638 = vmatprep.subr.bf16.mxu0 0
        %639 = vmatpush2.bf16.msra.mxu0 0
        %640 = vmatprep.subr.bf16.mxu0 0
        %641 = vmatpush2.bf16.msra.mxu0 0
        %642 = vmatprep.subr.bf16.mxu0 0
        %643 = vmatpush2.bf16.msra.mxu0 0
        %644 = vmatprep.subr.bf16.mxu0 0
        %645 = vmatpush2.bf16.msra.mxu0 0
        %646 = vmatprep.subr.bf16.mxu0 0
        %647 = vmatpush2.bf16.msra.mxu0 0
        %648 = vmatprep.mubr.bf16.mxu0 0
        %649 = vmatmul.mubr.bf16.gmra.mxu0 %v608
        %v650 = vpop.f32.mrf.mxu0
        %v651 = vadd.f32 0.0, %v650
        %v652 = vpop.f32.mrf.mxu0
        %v653 = vadd.f32 0.0, %v652
        %v654 = vpop.f32.mrf.mxu0
        %v655 = vpop.f32.mrf.mxu0
        %656 = vdwg.mxu0
        %v657 = vadd.f32 %v585, %v651
        %v658 = vadd.f32 %v586, %v653
        %s659 = scalar_lea.vmem %s1, 14
        %v660 = vld [vmem:[%s659] sm:$0x3]
        %v661 = vpack.c.bf16 %v210, %v210
        %v662 = vpack.c.bf16 %v211, %v211
        %v664 = vsel %vm245, %v660, 0
        %v667 = vsel %vm249, %v661, 0
        %v670 = vsel %vm249, %v662, 0
        %672 = vmatprep.subr.bf16.mxu0 0
        %673 = vmatpush1.bf16.msra.mxu0 0
        %674 = vmatprep.subr.bf16.mxu0 0
        %675 = vmatpush1.bf16.msra.mxu0 0
        %676 = vmatprep.subr.bf16.mxu0 0
        %677 = vmatpush1.bf16.msra.mxu0 0
        %678 = vmatprep.subr.bf16.mxu0 0
        %679 = vmatpush1.bf16.msra.mxu0 0
        %680 = vmatprep.subr.bf16.mxu0 0
        %681 = vmatpush1.bf16.msra.mxu0 0
        %682 = vmatprep.subr.bf16.mxu0 0
        %683 = vmatpush1.bf16.msra.mxu0 0
        %684 = vmatprep.subr.bf16.mxu0 0
        %685 = vmatpush1.bf16.msra.mxu0 0
        %686 = vmatprep.subr.bf16.mxu0 %v670
        %687 = vmatpush1.bf16.msra.mxu0 %v667
        %688 = vmatprep.subr.bf16.mxu0 0
        %689 = vmatpush2.bf16.msra.mxu0 0
        %690 = vmatprep.subr.bf16.mxu0 0
        %691 = vmatpush2.bf16.msra.mxu0 0
        %692 = vmatprep.subr.bf16.mxu0 0
        %693 = vmatpush2.bf16.msra.mxu0 0
        %694 = vmatprep.subr.bf16.mxu0 0
        %695 = vmatpush2.bf16.msra.mxu0 0
        %696 = vmatprep.subr.bf16.mxu0 0
        %697 = vmatpush2.bf16.msra.mxu0 0
        %698 = vmatprep.subr.bf16.mxu0 0
        %699 = vmatpush2.bf16.msra.mxu0 0
        %700 = vmatprep.subr.bf16.mxu0 0
        %701 = vmatpush2.bf16.msra.mxu0 0
        %702 = vmatprep.subr.bf16.mxu0 0
        %703 = vmatpush2.bf16.msra.mxu0 0
        %704 = vmatprep.mubr.bf16.mxu0 0
        %705 = vmatmul.mubr.bf16.gmra.mxu0 %v664
        %v706 = vpop.f32.mrf.mxu0
        %v707 = vadd.f32 0.0, %v706
        %v708 = vpop.f32.mrf.mxu0
        %v709 = vadd.f32 0.0, %v708
        %v710 = vpop.f32.mrf.mxu0
        %v711 = vpop.f32.mrf.mxu0
        %712 = vdwg.mxu0
        %v713 = vadd.f32 %v657, %v707
        %v714 = vadd.f32 %v658, %v709
        %s715 = scalar_lea.vmem %s1, 16
        %v716 = vld [vmem:[%s715] sm:$0x3]
        %v717 = vpack.c.bf16 %v601, %v601
        %v718 = vpack.c.bf16 %v602, %v602
        %v720 = vsel %vm245, %v716, 0
        %v723 = vsel %vm249, %v717, 0
        %v726 = vsel %vm249, %v718, 0
        %728 = vmatprep.subr.bf16.mxu0 0
        %729 = vmatpush1.bf16.msra.mxu0 0
        %730 = vmatprep.subr.bf16.mxu0 0
        %731 = vmatpush1.bf16.msra.mxu0 0
        %732 = vmatprep.subr.bf16.mxu0 0
        %733 = vmatpush1.bf16.msra.mxu0 0
        %734 = vmatprep.subr.bf16.mxu0 0
        %735 = vmatpush1.bf16.msra.mxu0 0
        %736 = vmatprep.subr.bf16.mxu0 0
        %737 = vmatpush1.bf16.msra.mxu0 0
        %738 = vmatprep.subr.bf16.mxu0 0
        %739 = vmatpush1.bf16.msra.mxu0 0
        %740 = vmatprep.subr.bf16.mxu0 0
        %741 = vmatpush1.bf16.msra.mxu0 0
        %742 = vmatprep.subr.bf16.mxu0 %v726
        %743 = vmatpush1.bf16.msra.mxu0 %v723
        %744 = vmatprep.subr.bf16.mxu0 0
        %745 = vmatpush2.bf16.msra.mxu0 0
        %746 = vmatprep.subr.bf16.mxu0 0
        %747 = vmatpush2.bf16.msra.mxu0 0
        %748 = vmatprep.subr.bf16.mxu0 0
        %749 = vmatpush2.bf16.msra.mxu0 0
        %750 = vmatprep.subr.bf16.mxu0 0
        %751 = vmatpush2.bf16.msra.mxu0 0
        %752 = vmatprep.subr.bf16.mxu0 0
        %753 = vmatpush2.bf16.msra.mxu0 0
        %754 = vmatprep.subr.bf16.mxu0 0
        %755 = vmatpush2.bf16.msra.mxu0 0
        %756 = vmatprep.subr.bf16.mxu0 0
        %757 = vmatpush2.bf16.msra.mxu0 0
        %758 = vmatprep.subr.bf16.mxu0 0
        %759 = vmatpush2.bf16.msra.mxu0 0
        %760 = vmatprep.mubr.bf16.mxu0 0
        %761 = vmatmul.mubr.bf16.gmra.mxu0 %v720
        %v762 = vpop.f32.mrf.mxu0
        %v763 = vadd.f32 0.0, %v762
        %v764 = vpop.f32.mrf.mxu0
        %v765 = vadd.f32 0.0, %v764
        %v766 = vpop.f32.mrf.mxu0
        %v767 = vpop.f32.mrf.mxu0
        %768 = vdwg.mxu0
        %v769 = vadd.f32 %v713, %v763
        %v770 = vadd.f32 %v714, %v765
        %vm771 = vcmask 1043456
        %v772 = vsel %vm771, %v769, 0.0
        %v773 = vsel %vm771, %v770, 0.0
        %v774 = vadd.f32 %v772, %v773
        %775 = vadd.xlane.f32.xlu0 %v774
        %v776 = vpop.xlane.xlu0 %775
        %v777 = vmul.f32 %v776, 0.00390625
        %v778 = vmul.f32 %v769, %v769
        %v779 = vmul.f32 %v770, %v770
        %v780 = vsel %vm771, %v778, 0.0
        %v781 = vsel %vm771, %v779, 0.0
        %v782 = vadd.f32 %v780, %v781
        %783 = vadd.xlane.f32.xlu0 %v782
        %v784 = vpop.xlane.xlu0 %783
        %v785 = vmul.f32 %v784, 0.00390625
        %v786 = vmul.f32 %v777, %v777
        %v787 = vsub.f32 %v785, %v786
        %v788 = vsub.f32 %v769, %v777
        %v789 = vsub.f32 %v770, %v777
        %v790 = vadd.f32 %v787, 1e-05
        %v791 = vrsqrt.pop %v790
        %v792 = vmul.f32 %v788, %v791
        %v793 = vmul.f32 %v789, %v791
        %v794 = vmax.f32 %v792, 0.0
        %v795 = vmax.f32 %v793, 0.0
        %796 = vrot.lane.b32.xlu0 %v794, 16
        %v797 = vpop.permute.xlu0 %796
        %798 = vrot.lane.b32.xlu0 %v795, 16
        %v799 = vpop.permute.xlu0 %798
        %v800 = vsel %vm174, %v797, %v799
        %v801 = vsel %vm174, %v799, %v797
        %802 = vrot.lane.b32.xlu0 %v794, 112
        %v803 = vpop.permute.xlu0 %802
        %804 = vrot.lane.b32.xlu0 %v795, 112
        %v805 = vpop.permute.xlu0 %804
        %v806 = vsel %vm197, %v803, %v805
        %v807 = vsel %vm197, %v805, %v803
        %v808 = vsel %vm202, %v806, %v801
        %v809 = vsel %vm203, %v807, %v800
        %v810 = vsel %vm208, %v801, %v806
        %v811 = vsel %vm209, %v800, %v807
        %812 = vrot.lane.b32.xlu0 %v808, 1
        %v813 = vpop.permute.xlu0 %812
        %814 = vrot.lane.b32.xlu0 %v809, 1
        %v815 = vpop.permute.xlu0 %814
        %v816 = vsel %vm216, %v813, %v815
        %v817 = vsel %vm216, %v815, %v813
        %818 = vrot.lane.b32.xlu0 %v808, 127
        %v819 = vpop.permute.xlu0 %818
        %820 = vrot.lane.b32.xlu0 %v809, 127
        %v821 = vpop.permute.xlu0 %820
        %v822 = vsel %vm223, %v819, %v821
        %v823 = vsel %vm223, %v821, %v819
        %v824 = vsel %vm228, %v822, %v817
        %v825 = vsel %vm229, %v823, %v816
        %v826 = vsel %vm234, %v817, %v822
        %v827 = vsel %vm235, %v816, %v823
        %v828 = vld [vmem:[%s2] sm:$0x3]
        %v829 = vpack.c.bf16 %v824, %v824
        %v830 = vpack.c.bf16 %v825, %v825
        %s831 = scalar_lea.vmem %s2, 2
        %v832 = vld [vmem:[%s831] sm:$0x3]
        %v833 = vpack.c.bf16 %v808, %v808
        %v834 = vpack.c.bf16 %v809, %v809
        %v836 = vsel %vm245, %v832, 0
        %v839 = vsel %vm249, %v833, 0
        %v842 = vsel %vm249, %v834, 0
        %844 = vmatprep.subr.bf16.mxu0 0
        %845 = vmatpush1.bf16.msra.mxu0 0
        %846 = vmatprep.subr.bf16.mxu0 0
        %847 = vmatpush1.bf16.msra.mxu0 0
        %848 = vmatprep.subr.bf16.mxu0 0
        %849 = vmatpush1.bf16.msra.mxu0 0
        %850 = vmatprep.subr.bf16.mxu0 0
        %851 = vmatpush1.bf16.msra.mxu0 0
        %852 = vmatprep.subr.bf16.mxu0 0
        %853 = vmatpush1.bf16.msra.mxu0 0
        %854 = vmatprep.subr.bf16.mxu0 0
        %855 = vmatpush1.bf16.msra.mxu0 0
        %856 = vmatprep.subr.bf16.mxu0 0
        %857 = vmatpush1.bf16.msra.mxu0 0
        %858 = vmatprep.subr.bf16.mxu0 %v842
        %859 = vmatpush1.bf16.msra.mxu0 %v839
        %860 = vmatprep.subr.bf16.mxu0 0
        %861 = vmatpush2.bf16.msra.mxu0 0
        %862 = vmatprep.subr.bf16.mxu0 0
        %863 = vmatpush2.bf16.msra.mxu0 0
        %864 = vmatprep.subr.bf16.mxu0 0
        %865 = vmatpush2.bf16.msra.mxu0 0
        %866 = vmatprep.subr.bf16.mxu0 0
        %867 = vmatpush2.bf16.msra.mxu0 0
        %868 = vmatprep.subr.bf16.mxu0 0
        %869 = vmatpush2.bf16.msra.mxu0 0
        %870 = vmatprep.subr.bf16.mxu0 0
        %871 = vmatpush2.bf16.msra.mxu0 0
        %872 = vmatprep.subr.bf16.mxu0 0
        %873 = vmatpush2.bf16.msra.mxu0 0
        %874 = vmatprep.subr.bf16.mxu0 0
        %875 = vmatpush2.bf16.msra.mxu0 0
        %876 = vmatprep.mubr.bf16.mxu0 0
        %877 = vmatmul.mubr.bf16.gmra.mxu0 %v836
        %v878 = vpop.f32.mrf.mxu0
        %v879 = vadd.f32 0.0, %v878
        %v880 = vpop.f32.mrf.mxu0
        %v881 = vadd.f32 0.0, %v880
        %v882 = vpop.f32.mrf.mxu0
        %v883 = vpop.f32.mrf.mxu0
        %884 = vdwg.mxu0
        %v886 = vsel %vm245, %v828, 0
        %v889 = vsel %vm249, %v829, 0
        %v892 = vsel %vm249, %v830, 0
        %894 = vmatprep.subr.bf16.mxu0 0
        %895 = vmatpush1.bf16.msra.mxu0 0
        %896 = vmatprep.subr.bf16.mxu0 0
        %897 = vmatpush1.bf16.msra.mxu0 0
        %898 = vmatprep.subr.bf16.mxu0 0
        %899 = vmatpush1.bf16.msra.mxu0 0
        %900 = vmatprep.subr.bf16.mxu0 0
        %901 = vmatpush1.bf16.msra.mxu0 0
        %902 = vmatprep.subr.bf16.mxu0 0
        %903 = vmatpush1.bf16.msra.mxu0 0
        %904 = vmatprep.subr.bf16.mxu0 0
        %905 = vmatpush1.bf16.msra.mxu0 0
        %906 = vmatprep.subr.bf16.mxu0 0
        %907 = vmatpush1.bf16.msra.mxu0 0
        %908 = vmatprep.subr.bf16.mxu0 %v892
        %909 = vmatpush1.bf16.msra.mxu0 %v889
        %910 = vmatprep.subr.bf16.mxu0 0
        %911 = vmatpush2.bf16.msra.mxu0 0
        %912 = vmatprep.subr.bf16.mxu0 0
        %913 = vmatpush2.bf16.msra.mxu0 0
        %914 = vmatprep.subr.bf16.mxu0 0
        %915 = vmatpush2.bf16.msra.mxu0 0
        %916 = vmatprep.subr.bf16.mxu0 0
        %917 = vmatpush2.bf16.msra.mxu0 0
        %918 = vmatprep.subr.bf16.mxu0 0
        %919 = vmatpush2.bf16.msra.mxu0 0
        %920 = vmatprep.subr.bf16.mxu0 0
        %921 = vmatpush2.bf16.msra.mxu0 0
        %922 = vmatprep.subr.bf16.mxu0 0
        %923 = vmatpush2.bf16.msra.mxu0 0
        %924 = vmatprep.subr.bf16.mxu0 0
        %925 = vmatpush2.bf16.msra.mxu0 0
        %926 = vmatprep.mubr.bf16.mxu0 0
        %927 = vmatmul.mubr.bf16.gmra.mxu0 %v886
        %v928 = vpop.f32.mrf.mxu0
        %v929 = vadd.f32 %v879, %v928
        %v930 = vpop.f32.mrf.mxu0
        %v931 = vadd.f32 %v881, %v930
        %v932 = vpop.f32.mrf.mxu0
        %v933 = vpop.f32.mrf.mxu0
        %934 = vdwg.mxu0
        %s935 = scalar_lea.vmem %s2, 4
        %v936 = vld [vmem:[%s935] sm:$0x3]
        %v937 = vpack.c.bf16 %v826, %v826
        %v938 = vpack.c.bf16 %v827, %v827
        %v940 = vsel %vm245, %v936, 0
        %v943 = vsel %vm249, %v937, 0
        %v946 = vsel %vm249, %v938, 0
        %948 = vmatprep.subr.bf16.mxu0 0
        %949 = vmatpush1.bf16.msra.mxu0 0
        %950 = vmatprep.subr.bf16.mxu0 0
        %951 = vmatpush1.bf16.msra.mxu0 0
        %952 = vmatprep.subr.bf16.mxu0 0
        %953 = vmatpush1.bf16.msra.mxu0 0
        %954 = vmatprep.subr.bf16.mxu0 0
        %955 = vmatpush1.bf16.msra.mxu0 0
        %956 = vmatprep.subr.bf16.mxu0 0
        %957 = vmatpush1.bf16.msra.mxu0 0
        %958 = vmatprep.subr.bf16.mxu0 0
        %959 = vmatpush1.bf16.msra.mxu0 0
        %960 = vmatprep.subr.bf16.mxu0 0
        %961 = vmatpush1.bf16.msra.mxu0 0
        %962 = vmatprep.subr.bf16.mxu0 %v946
        %963 = vmatpush1.bf16.msra.mxu0 %v943
        %964 = vmatprep.subr.bf16.mxu0 0
        %965 = vmatpush2.bf16.msra.mxu0 0
        %966 = vmatprep.subr.bf16.mxu0 0
        %967 = vmatpush2.bf16.msra.mxu0 0
        %968 = vmatprep.subr.bf16.mxu0 0
        %969 = vmatpush2.bf16.msra.mxu0 0
        %970 = vmatprep.subr.bf16.mxu0 0
        %971 = vmatpush2.bf16.msra.mxu0 0
        %972 = vmatprep.subr.bf16.mxu0 0
        %973 = vmatpush2.bf16.msra.mxu0 0
        %974 = vmatprep.subr.bf16.mxu0 0
        %975 = vmatpush2.bf16.msra.mxu0 0
        %976 = vmatprep.subr.bf16.mxu0 0
        %977 = vmatpush2.bf16.msra.mxu0 0
        %978 = vmatprep.subr.bf16.mxu0 0
        %979 = vmatpush2.bf16.msra.mxu0 0
        %980 = vmatprep.mubr.bf16.mxu0 0
        %981 = vmatmul.mubr.bf16.gmra.mxu0 %v940
        %v982 = vpop.f32.mrf.mxu0
        %v983 = vadd.f32 0.0, %v982
        %v984 = vpop.f32.mrf.mxu0
        %v985 = vadd.f32 0.0, %v984
        %v986 = vpop.f32.mrf.mxu0
        %v987 = vpop.f32.mrf.mxu0
        %988 = vdwg.mxu0
        %v989 = vadd.f32 %v929, %v983
        %v990 = vadd.f32 %v931, %v985
        %991 = vrot.lane.b32.xlu0 %v794, 1
        %v992 = vpop.permute.xlu0 %991
        %993 = vrot.lane.b32.xlu0 %v795, 1
        %v994 = vpop.permute.xlu0 %993
        %v995 = vsel %vm216, %v992, %v994
        %v996 = vsel %vm216, %v994, %v992
        %997 = vrot.lane.b32.xlu0 %v794, 127
        %v998 = vpop.permute.xlu0 %997
        %999 = vrot.lane.b32.xlu0 %v795, 127
        %v1000 = vpop.permute.xlu0 %999
        %v1001 = vsel %vm223, %v998, %v1000
        %v1002 = vsel %vm223, %v1000, %v998
        %v1003 = vsel %vm228, %v1001, %v996
        %v1004 = vsel %vm229, %v1002, %v995
        %v1005 = vsel %vm234, %v996, %v1001
        %v1006 = vsel %vm235, %v995, %v1002
        %s1007 = scalar_lea.vmem %s2, 6
        %v1008 = vld [vmem:[%s1007] sm:$0x3]
        %v1009 = vpack.c.bf16 %v1003, %v1003
        %v1010 = vpack.c.bf16 %v1004, %v1004
        %v1012 = vsel %vm245, %v1008, 0
        %v1015 = vsel %vm249, %v1009, 0
        %v1018 = vsel %vm249, %v1010, 0
        %1020 = vmatprep.subr.bf16.mxu0 0
        %1021 = vmatpush1.bf16.msra.mxu0 0
        %1022 = vmatprep.subr.bf16.mxu0 0
        %1023 = vmatpush1.bf16.msra.mxu0 0
        %1024 = vmatprep.subr.bf16.mxu0 0
        %1025 = vmatpush1.bf16.msra.mxu0 0
        %1026 = vmatprep.subr.bf16.mxu0 0
        %1027 = vmatpush1.bf16.msra.mxu0 0
        %1028 = vmatprep.subr.bf16.mxu0 0
        %1029 = vmatpush1.bf16.msra.mxu0 0
        %1030 = vmatprep.subr.bf16.mxu0 0
        %1031 = vmatpush1.bf16.msra.mxu0 0
        %1032 = vmatprep.subr.bf16.mxu0 0
        %1033 = vmatpush1.bf16.msra.mxu0 0
        %1034 = vmatprep.subr.bf16.mxu0 %v1018
        %1035 = vmatpush1.bf16.msra.mxu0 %v1015
        %1036 = vmatprep.subr.bf16.mxu0 0
        %1037 = vmatpush2.bf16.msra.mxu0 0
        %1038 = vmatprep.subr.bf16.mxu0 0
        %1039 = vmatpush2.bf16.msra.mxu0 0
        %1040 = vmatprep.subr.bf16.mxu0 0
        %1041 = vmatpush2.bf16.msra.mxu0 0
        %1042 = vmatprep.subr.bf16.mxu0 0
        %1043 = vmatpush2.bf16.msra.mxu0 0
        %1044 = vmatprep.subr.bf16.mxu0 0
        %1045 = vmatpush2.bf16.msra.mxu0 0
        %1046 = vmatprep.subr.bf16.mxu0 0
        %1047 = vmatpush2.bf16.msra.mxu0 0
        %1048 = vmatprep.subr.bf16.mxu0 0
        %1049 = vmatpush2.bf16.msra.mxu0 0
        %1050 = vmatprep.subr.bf16.mxu0 0
        %1051 = vmatpush2.bf16.msra.mxu0 0
        %1052 = vmatprep.mubr.bf16.mxu0 0
        %1053 = vmatmul.mubr.bf16.gmra.mxu0 %v1012
        %v1054 = vpop.f32.mrf.mxu0
        %v1055 = vadd.f32 0.0, %v1054
        %v1056 = vpop.f32.mrf.mxu0
        %v1057 = vadd.f32 0.0, %v1056
        %v1058 = vpop.f32.mrf.mxu0
        %v1059 = vpop.f32.mrf.mxu0
        %1060 = vdwg.mxu0
        %v1061 = vadd.f32 %v989, %v1055
        %v1062 = vadd.f32 %v990, %v1057
        %s1063 = scalar_lea.vmem %s2, 8
        %v1064 = vld [vmem:[%s1063] sm:$0x3]
        %v1065 = vpack.c.bf16 %v794, %v794
        %v1066 = vpack.c.bf16 %v795, %v795
        %v1068 = vsel %vm245, %v1064, 0
        %v1071 = vsel %vm249, %v1065, 0
        %v1074 = vsel %vm249, %v1066, 0
        %1076 = vmatprep.subr.bf16.mxu0 0
        %1077 = vmatpush1.bf16.msra.mxu0 0
        %1078 = vmatprep.subr.bf16.mxu0 0
        %1079 = vmatpush1.bf16.msra.mxu0 0
        %1080 = vmatprep.subr.bf16.mxu0 0
        %1081 = vmatpush1.bf16.msra.mxu0 0
        %1082 = vmatprep.subr.bf16.mxu0 0
        %1083 = vmatpush1.bf16.msra.mxu0 0
        %1084 = vmatprep.subr.bf16.mxu0 0
        %1085 = vmatpush1.bf16.msra.mxu0 0
        %1086 = vmatprep.subr.bf16.mxu0 0
        %1087 = vmatpush1.bf16.msra.mxu0 0
        %1088 = vmatprep.subr.bf16.mxu0 0
        %1089 = vmatpush1.bf16.msra.mxu0 0
        %1090 = vmatprep.subr.bf16.mxu0 %v1074
        %1091 = vmatpush1.bf16.msra.mxu0 %v1071
        %1092 = vmatprep.subr.bf16.mxu0 0
        %1093 = vmatpush2.bf16.msra.mxu0 0
        %1094 = vmatprep.subr.bf16.mxu0 0
        %1095 = vmatpush2.bf16.msra.mxu0 0
        %1096 = vmatprep.subr.bf16.mxu0 0
        %1097 = vmatpush2.bf16.msra.mxu0 0
        %1098 = vmatprep.subr.bf16.mxu0 0
        %1099 = vmatpush2.bf16.msra.mxu0 0
        %1100 = vmatprep.subr.bf16.mxu0 0
        %1101 = vmatpush2.bf16.msra.mxu0 0
        %1102 = vmatprep.subr.bf16.mxu0 0
        %1103 = vmatpush2.bf16.msra.mxu0 0
        %1104 = vmatprep.subr.bf16.mxu0 0
        %1105 = vmatpush2.bf16.msra.mxu0 0
        %1106 = vmatprep.subr.bf16.mxu0 0
        %1107 = vmatpush2.bf16.msra.mxu0 0
        %1108 = vmatprep.mubr.bf16.mxu0 0
        %1109 = vmatmul.mubr.bf16.gmra.mxu0 %v1068
        %v1110 = vpop.f32.mrf.mxu0
        %v1111 = vadd.f32 0.0, %v1110
        %v1112 = vpop.f32.mrf.mxu0
        %v1113 = vadd.f32 0.0, %v1112
        %v1114 = vpop.f32.mrf.mxu0
        %v1115 = vpop.f32.mrf.mxu0
        %1116 = vdwg.mxu0
        %v1117 = vadd.f32 %v1061, %v1111
        %v1118 = vadd.f32 %v1062, %v1113
        %s1119 = scalar_lea.vmem %s2, 10
        %v1120 = vld [vmem:[%s1119] sm:$0x3]
        %v1121 = vpack.c.bf16 %v1005, %v1005
        %v1122 = vpack.c.bf16 %v1006, %v1006
        %v1124 = vsel %vm245, %v1120, 0
        %v1127 = vsel %vm249, %v1121, 0
        %v1130 = vsel %vm249, %v1122, 0
        %1132 = vmatprep.subr.bf16.mxu0 0
        %1133 = vmatpush1.bf16.msra.mxu0 0
        %1134 = vmatprep.subr.bf16.mxu0 0
        %1135 = vmatpush1.bf16.msra.mxu0 0
        %1136 = vmatprep.subr.bf16.mxu0 0
        %1137 = vmatpush1.bf16.msra.mxu0 0
        %1138 = vmatprep.subr.bf16.mxu0 0
        %1139 = vmatpush1.bf16.msra.mxu0 0
        %1140 = vmatprep.subr.bf16.mxu0 0
        %1141 = vmatpush1.bf16.msra.mxu0 0
        %1142 = vmatprep.subr.bf16.mxu0 0
        %1143 = vmatpush1.bf16.msra.mxu0 0
        %1144 = vmatprep.subr.bf16.mxu0 0
        %1145 = vmatpush1.bf16.msra.mxu0 0
        %1146 = vmatprep.subr.bf16.mxu0 %v1130
        %1147 = vmatpush1.bf16.msra.mxu0 %v1127
        %1148 = vmatprep.subr.bf16.mxu0 0
        %1149 = vmatpush2.bf16.msra.mxu0 0
        %1150 = vmatprep.subr.bf16.mxu0 0
        %1151 = vmatpush2.bf16.msra.mxu0 0
        %1152 = vmatprep.subr.bf16.mxu0 0
        %1153 = vmatpush2.bf16.msra.mxu0 0
        %1154 = vmatprep.subr.bf16.mxu0 0
        %1155 = vmatpush2.bf16.msra.mxu0 0
        %1156 = vmatprep.subr.bf16.mxu0 0
        %1157 = vmatpush2.bf16.msra.mxu0 0
        %1158 = vmatprep.subr.bf16.mxu0 0
        %1159 = vmatpush2.bf16.msra.mxu0 0
        %1160 = vmatprep.subr.bf16.mxu0 0
        %1161 = vmatpush2.bf16.msra.mxu0 0
        %1162 = vmatprep.subr.bf16.mxu0 0
        %1163 = vmatpush2.bf16.msra.mxu0 0
        %1164 = vmatprep.mubr.bf16.mxu0 0
        %1165 = vmatmul.mubr.bf16.gmra.mxu0 %v1124
        %v1166 = vpop.f32.mrf.mxu0
        %v1167 = vadd.f32 0.0, %v1166
        %v1168 = vpop.f32.mrf.mxu0
        %v1169 = vadd.f32 0.0, %v1168
        %v1170 = vpop.f32.mrf.mxu0
        %v1171 = vpop.f32.mrf.mxu0
        %1172 = vdwg.mxu0
        %v1173 = vadd.f32 %v1117, %v1167
        %v1174 = vadd.f32 %v1118, %v1169
        %1175 = vrot.lane.b32.xlu0 %v810, 1
        %v1176 = vpop.permute.xlu0 %1175
        %1177 = vrot.lane.b32.xlu0 %v811, 1
        %v1178 = vpop.permute.xlu0 %1177
        %v1179 = vsel %vm216, %v1176, %v1178
        %v1180 = vsel %vm216, %v1178, %v1176
        %1181 = vrot.lane.b32.xlu0 %v810, 127
        %v1182 = vpop.permute.xlu0 %1181
        %1183 = vrot.lane.b32.xlu0 %v811, 127
        %v1184 = vpop.permute.xlu0 %1183
        %v1185 = vsel %vm223, %v1182, %v1184
        %v1186 = vsel %vm223, %v1184, %v1182
        %v1187 = vsel %vm228, %v1185, %v1180
        %v1188 = vsel %vm229, %v1186, %v1179
        %v1189 = vsel %vm234, %v1180, %v1185
        %v1190 = vsel %vm235, %v1179, %v1186
        %s1191 = scalar_lea.vmem %s2, 12
        %v1192 = vld [vmem:[%s1191] sm:$0x3]
        %v1193 = vpack.c.bf16 %v1187, %v1187
        %v1194 = vpack.c.bf16 %v1188, %v1188
        %v1196 = vsel %vm245, %v1192, 0
        %v1199 = vsel %vm249, %v1193, 0
        %v1202 = vsel %vm249, %v1194, 0
        %1204 = vmatprep.subr.bf16.mxu0 0
        %1205 = vmatpush1.bf16.msra.mxu0 0
        %1206 = vmatprep.subr.bf16.mxu0 0
        %1207 = vmatpush1.bf16.msra.mxu0 0
        %1208 = vmatprep.subr.bf16.mxu0 0
        %1209 = vmatpush1.bf16.msra.mxu0 0
        %1210 = vmatprep.subr.bf16.mxu0 0
        %1211 = vmatpush1.bf16.msra.mxu0 0
        %1212 = vmatprep.subr.bf16.mxu0 0
        %1213 = vmatpush1.bf16.msra.mxu0 0
        %1214 = vmatprep.subr.bf16.mxu0 0
        %1215 = vmatpush1.bf16.msra.mxu0 0
        %1216 = vmatprep.subr.bf16.mxu0 0
        %1217 = vmatpush1.bf16.msra.mxu0 0
        %1218 = vmatprep.subr.bf16.mxu0 %v1202
        %1219 = vmatpush1.bf16.msra.mxu0 %v1199
        %1220 = vmatprep.subr.bf16.mxu0 0
        %1221 = vmatpush2.bf16.msra.mxu0 0
        %1222 = vmatprep.subr.bf16.mxu0 0
        %1223 = vmatpush2.bf16.msra.mxu0 0
        %1224 = vmatprep.subr.bf16.mxu0 0
        %1225 = vmatpush2.bf16.msra.mxu0 0
        %1226 = vmatprep.subr.bf16.mxu0 0
        %1227 = vmatpush2.bf16.msra.mxu0 0
        %1228 = vmatprep.subr.bf16.mxu0 0
        %1229 = vmatpush2.bf16.msra.mxu0 0
        %1230 = vmatprep.subr.bf16.mxu0 0
        %1231 = vmatpush2.bf16.msra.mxu0 0
        %1232 = vmatprep.subr.bf16.mxu0 0
        %1233 = vmatpush2.bf16.msra.mxu0 0
        %1234 = vmatprep.subr.bf16.mxu0 0
        %1235 = vmatpush2.bf16.msra.mxu0 0
        %1236 = vmatprep.mubr.bf16.mxu0 0
        %1237 = vmatmul.mubr.bf16.gmra.mxu0 %v1196
        %v1238 = vpop.f32.mrf.mxu0
        %v1239 = vadd.f32 0.0, %v1238
        %v1240 = vpop.f32.mrf.mxu0
        %v1241 = vadd.f32 0.0, %v1240
        %v1242 = vpop.f32.mrf.mxu0
        %v1243 = vpop.f32.mrf.mxu0
        %1244 = vdwg.mxu0
        %v1245 = vadd.f32 %v1173, %v1239
        %v1246 = vadd.f32 %v1174, %v1241
        %s1247 = scalar_lea.vmem %s2, 14
        %v1248 = vld [vmem:[%s1247] sm:$0x3]
        %v1249 = vpack.c.bf16 %v810, %v810
        %v1250 = vpack.c.bf16 %v811, %v811
        %v1252 = vsel %vm245, %v1248, 0
        %v1255 = vsel %vm249, %v1249, 0
        %v1258 = vsel %vm249, %v1250, 0
        %1260 = vmatprep.subr.bf16.mxu0 0
        %1261 = vmatpush1.bf16.msra.mxu0 0
        %1262 = vmatprep.subr.bf16.mxu0 0
        %1263 = vmatpush1.bf16.msra.mxu0 0
        %1264 = vmatprep.subr.bf16.mxu0 0
        %1265 = vmatpush1.bf16.msra.mxu0 0
        %1266 = vmatprep.subr.bf16.mxu0 0
        %1267 = vmatpush1.bf16.msra.mxu0 0
        %1268 = vmatprep.subr.bf16.mxu0 0
        %1269 = vmatpush1.bf16.msra.mxu0 0
        %1270 = vmatprep.subr.bf16.mxu0 0
        %1271 = vmatpush1.bf16.msra.mxu0 0
        %1272 = vmatprep.subr.bf16.mxu0 0
        %1273 = vmatpush1.bf16.msra.mxu0 0
        %1274 = vmatprep.subr.bf16.mxu0 %v1258
        %1275 = vmatpush1.bf16.msra.mxu0 %v1255
        %1276 = vmatprep.subr.bf16.mxu0 0
        %1277 = vmatpush2.bf16.msra.mxu0 0
        %1278 = vmatprep.subr.bf16.mxu0 0
        %1279 = vmatpush2.bf16.msra.mxu0 0
        %1280 = vmatprep.subr.bf16.mxu0 0
        %1281 = vmatpush2.bf16.msra.mxu0 0
        %1282 = vmatprep.subr.bf16.mxu0 0
        %1283 = vmatpush2.bf16.msra.mxu0 0
        %1284 = vmatprep.subr.bf16.mxu0 0
        %1285 = vmatpush2.bf16.msra.mxu0 0
        %1286 = vmatprep.subr.bf16.mxu0 0
        %1287 = vmatpush2.bf16.msra.mxu0 0
        %1288 = vmatprep.subr.bf16.mxu0 0
        %1289 = vmatpush2.bf16.msra.mxu0 0
        %1290 = vmatprep.subr.bf16.mxu0 0
        %1291 = vmatpush2.bf16.msra.mxu0 0
        %1292 = vmatprep.mubr.bf16.mxu0 0
        %1293 = vmatmul.mubr.bf16.gmra.mxu0 %v1252
        %v1294 = vpop.f32.mrf.mxu0
        %v1295 = vadd.f32 0.0, %v1294
        %v1296 = vpop.f32.mrf.mxu0
        %v1297 = vadd.f32 0.0, %v1296
        %v1298 = vpop.f32.mrf.mxu0
        %v1299 = vpop.f32.mrf.mxu0
        %1300 = vdwg.mxu0
        %v1301 = vadd.f32 %v1245, %v1295
        %v1302 = vadd.f32 %v1246, %v1297
        %s1303 = scalar_lea.vmem %s2, 16
        %v1304 = vld [vmem:[%s1303] sm:$0x3]
        %v1305 = vpack.c.bf16 %v1189, %v1189
        %v1306 = vpack.c.bf16 %v1190, %v1190
        %v1308 = vsel %vm245, %v1304, 0
        %v1311 = vsel %vm249, %v1305, 0
        %v1314 = vsel %vm249, %v1306, 0
        %1316 = vmatprep.subr.bf16.mxu0 0
        %1317 = vmatpush1.bf16.msra.mxu0 0
        %1318 = vmatprep.subr.bf16.mxu0 0
        %1319 = vmatpush1.bf16.msra.mxu0 0
        %1320 = vmatprep.subr.bf16.mxu0 0
        %1321 = vmatpush1.bf16.msra.mxu0 0
        %1322 = vmatprep.subr.bf16.mxu0 0
        %1323 = vmatpush1.bf16.msra.mxu0 0
        %1324 = vmatprep.subr.bf16.mxu0 0
        %1325 = vmatpush1.bf16.msra.mxu0 0
        %1326 = vmatprep.subr.bf16.mxu0 0
        %1327 = vmatpush1.bf16.msra.mxu0 0
        %1328 = vmatprep.subr.bf16.mxu0 0
        %1329 = vmatpush1.bf16.msra.mxu0 0
        %1330 = vmatprep.subr.bf16.mxu0 %v1314
        %1331 = vmatpush1.bf16.msra.mxu0 %v1311
        %1332 = vmatprep.subr.bf16.mxu0 0
        %1333 = vmatpush2.bf16.msra.mxu0 0
        %1334 = vmatprep.subr.bf16.mxu0 0
        %1335 = vmatpush2.bf16.msra.mxu0 0
        %1336 = vmatprep.subr.bf16.mxu0 0
        %1337 = vmatpush2.bf16.msra.mxu0 0
        %1338 = vmatprep.subr.bf16.mxu0 0
        %1339 = vmatpush2.bf16.msra.mxu0 0
        %1340 = vmatprep.subr.bf16.mxu0 0
        %1341 = vmatpush2.bf16.msra.mxu0 0
        %1342 = vmatprep.subr.bf16.mxu0 0
        %1343 = vmatpush2.bf16.msra.mxu0 0
        %1344 = vmatprep.subr.bf16.mxu0 0
        %1345 = vmatpush2.bf16.msra.mxu0 0
        %1346 = vmatprep.subr.bf16.mxu0 0
        %1347 = vmatpush2.bf16.msra.mxu0 0
        %1348 = vmatprep.mubr.bf16.mxu0 0
        %1349 = vmatmul.mubr.bf16.gmra.mxu0 %v1308
        %v1350 = vpop.f32.mrf.mxu0
        %v1351 = vadd.f32 0.0, %v1350
        %v1352 = vpop.f32.mrf.mxu0
        %v1353 = vadd.f32 0.0, %v1352
        %v1354 = vpop.f32.mrf.mxu0
        %v1355 = vpop.f32.mrf.mxu0
        %1356 = vdwg.mxu0
        %v1357 = vadd.f32 %v1301, %v1351
        %v1358 = vadd.f32 %v1302, %v1353
        %v1359 = vsel %vm771, %v1357, 0.0
        %v1360 = vsel %vm771, %v1358, 0.0
        %v1361 = vadd.f32 %v1359, %v1360
        %1362 = vadd.xlane.f32.xlu0 %v1361
        %v1363 = vpop.xlane.xlu0 %1362
        %v1364 = vmul.f32 %v1363, 0.00390625
        %v1365 = vmul.f32 %v1357, %v1357
        %v1366 = vmul.f32 %v1358, %v1358
        %v1367 = vsel %vm771, %v1365, 0.0
        %v1368 = vsel %vm771, %v1366, 0.0
        %v1369 = vadd.f32 %v1367, %v1368
        %1370 = vadd.xlane.f32.xlu0 %v1369
        %v1371 = vpop.xlane.xlu0 %1370
        %v1372 = vmul.f32 %v1371, 0.00390625
        %v1373 = vmul.f32 %v1364, %v1364
        %v1374 = vsub.f32 %v1372, %v1373
        %v1375 = vsub.f32 %v1357, %v1364
        %v1376 = vsub.f32 %v1358, %v1364
        %v1377 = vadd.f32 %v1374, 1e-05
        %v1378 = vrsqrt.pop %v1377
        %v1379 = vmul.f32 %v1375, %v1378
        %v1380 = vmul.f32 %v1376, %v1378
        %v1383 = vcombine.low %v1379, %v1380
        %v1385 = vadd.f32 %v170, %v1383
        %1386 = vst [vmem:[%s163] sm:$0xff] %v1385
        %s1387 = sand.u32 %s93, 1
        %s1388 = scalar_lea.sflag [#allocation3], %s1387
        %s1389 = sand.u32 %s93, 1
        %s1390 = smul.addr %s1389, 8
        %s1391 = scalar_lea.vmem [#allocation2], %s1390
        // Predicated region
        $region33: #{tpu_custom_call.1} parent=31 // pred_check
          %p1392 = pneg %p103
        $region34: #{tpu_custom_call.1} parent=31 // pred_check_branch
          %1394 = sbr.rel (%p1392) target = $region36
        $region35: #{tpu_custom_call.1} parent=31 // pred_region
          %s1396 = ssub.s32 128, 128
          %1397 = vsyncadd %s1388, %s1396
          %s1398 = smul.addr %s17, 2
          %s1399 = smul.addr %s1398, 64
          %s1400 = scalar_lea.hbm %s3, %s1399
          %s1402 = sshll.u32 %s1391, 4
          %s1403 = int_to_ptr.vmem [resolvable:$true] %s1402
          %1405 = dma.vmem_to_hbm [thread:$0]  %s1403, 128, %s1400, %s1388
        $region36: #{tpu_custom_call.1} parent=31 // pred_fallthru
          _
      $region32: #{tpu_custom_call.1} parent=5 // pred_fallthru
        _
      %p1406 = scmp.le.s32.totalorder 2, %s12
      // Predicated region
      $region37: #{tpu_custom_call.1} parent=5 // pred_check
        %p1407 = pneg %p1406
      $region38: #{tpu_custom_call.1} parent=5 // pred_check_branch
        %1409 = sbr.rel (%p1407) target = $region40
      $region39: #{tpu_custom_call.1} parent=5 // pred_region
        %s1410 = ssub.s32 %s12, 2
        // Predicated region
        $region41: #{tpu_custom_call.1} parent=39 // pred_check
          %p1411 = pneg %p109
        $region42: #{tpu_custom_call.1} parent=39 // pred_check_branch
          %1413 = sbr.rel (%p1411) target = $region44
        $region43: #{tpu_custom_call.1} parent=39 // pred_region
          %s1414 = sand.u32 %s94, 1
          %s1415 = scalar_lea.sflag [#allocation3], %s1414
          %s1416 = sand.u32 %s94, 1
          %s1417 = smul.addr %s1416, 8
          %s1418 = scalar_lea.vmem [#allocation2], %s1417
          %1419 = dma.done %s1415, 128
        $region44: #{tpu_custom_call.1} parent=39 // pred_fallthru
          _
      $region40: #{tpu_custom_call.1} parent=5 // pred_fallthru
        _
    $region6: #{tpu_custom_call.1} parent=1 // loop_footer
      %s16 = sadd.s32 1, %s12
    $region7: #{tpu_custom_call.1} parent=1 // loop_footer_branch
      %11 = sbr.rel target = $region3
    $region8: #{tpu_custom_call.1} parent=1 // loop_exit
      _
    %1420 = vsyncpa [#allocation3], 1
    %s1421 = scalar_lea.sflag [#allocation3], 1
    %1422 = vsyncpa %s1421, 1

</llo_original>
